<compile_context>
chip_gen: v6e
topology: v6e:2x2x1
jax: 0.10.0
libtpu: 0.0.40
codegen_flags: <defaults>
</compile_context>

<pallas_src>
import jax
import jax.numpy as jnp
from jax.experimental import pallas as pl
from jax.experimental.pallas import tpu as pltpu


def _make_kernel(th, Wg, Wx):
    """th = low-resolution row tile; Wg/Wx = gating / skip widths."""

    def kernel(scal_ref,                       # SMEM (6,): b_psi, b_up, wt00..wt11
               g_ref, x_ref,                   # (1,F_g,th*Wg), (1,F_l,2*th,Wx)
               wg_ref, wx_ref, bcat_ref, wpsi_ref,   # BN-folded 1x1 conv params
               dmat_ref, ecol_ref,             # 0/1 column decimation / expansion
               o_ref,                          # (1,F_l,2*th,Wx)
               xg_scr, pp_scr):                # VMEM scratch
        f32 = jnp.float32
        b_psi = scal_ref[0]
        b_up = scal_ref[1]
        w00 = scal_ref[2]
        w01 = scal_ref[3]
        w10 = scal_ref[4]
        w11 = scal_ref[5]

        # ---- gather even rows of x + stride-2 column decimation -----------
        # Each iteration is a strided (sublane) ref load of one low-res row
        # across all channels plus a tiny 0/1 selection matmul on the idle
        # MXU; the result lands in a channels-on-sublanes (F_l, th*Wg)
        # scratch so the W_x conv below is a single lane-dense matmul.
        dmat = dmat_ref[...]                                   # (Wx, Wg)
        for h in range(th):                                    # static, tiny body
            row = x_ref[0, :, 2 * h, :].astype(f32)            # (F_l, Wx)
            xg_scr[:, h * Wg:(h + 1) * Wg] = jnp.dot(
                row, dmat, preferred_element_type=f32)         # (F_l, Wg)

        # ---- fused 1x1 convs (BN folded): two matmuls, one shared bias ----
        g1 = jnp.dot(wg_ref[...], g_ref[0].astype(f32),
                     preferred_element_type=f32)               # (F_int, th*Wg)
        x1 = jnp.dot(wx_ref[...], xg_scr[...],
                     preferred_element_type=f32)               # (F_int, th*Wg)
        a = jnp.maximum(g1 + x1 + bcat_ref[...], 0.0)
        s = jnp.dot(wpsi_ref[...], a, preferred_element_type=f32) + b_psi
        p = jax.nn.sigmoid(s)                                  # (1, th*Wg)

        # ---- un-flatten p and duplicate each row (2x H up-sampling) -------
        for h in range(th):                                    # tiny (Wg-wide) stores
            seg = p[:, h * Wg:(h + 1) * Wg]                    # (1, Wg)
            pp_scr[2 * h:2 * h + 1, :] = seg
            pp_scr[2 * h + 1:2 * h + 2, :] = seg

        # ---- 2x W up-sampling + 2x2 ConvTranspose weights ------------------
        pcol = jnp.dot(pp_scr[...], ecol_ref[...],
                       preferred_element_type=f32)             # (2*th, Wx)
        ri = jax.lax.broadcasted_iota(jnp.int32, (2 * th, Wx), 0) % 2
        ci = jax.lax.broadcasted_iota(jnp.int32, (2 * th, Wx), 1) % 2
        wtmap = jnp.where(ri == 0,
                          jnp.where(ci == 0, w00, w01),
                          jnp.where(ci == 0, w10, w11))
        factor = pcol * wtmap + b_up                           # (2*th, Wx) f32

        # ---- main memory-bound elementwise gate (multiply in x's dtype) ---
        o_ref[0] = (x_ref[0] * factor[None].astype(x_ref.dtype)
                    ).astype(o_ref.dtype)

    return kernel


def attention_block_forward(g, x, params, *, row_tile=None):
    N, F_g, Hg, Wg = g.shape
    Nx, F_l, Hx, Wx = x.shape
    assert Nx == N and Hx == 2 * Hg and Wx == 2 * Wg, \
        "skip input must be exactly 2x the gating resolution"
    F_int = params['wg_conv'].shape[0]
    eps = 1e-5

    def fold(conv_w, conv_b, gamma, beta, mean, var):
        # conv_w: (Cout, Cin, 1, 1); fold eval-mode BN into (Cout, Cin) + bias.
        s = gamma / jnp.sqrt(var + eps)
        w = conv_w[:, :, 0, 0] * s[:, None]
        b = (conv_b - mean) * s + beta
        return w.astype(jnp.float32), b.astype(jnp.float32)

    wg_f, bg_f = fold(params['wg_conv'], params['wg_bias'], *params['bn_g'])
    wx_f, bx_f = fold(params['wx_conv'], params['wx_bias'], *params['bn_x'])
    wp_f, bp_f = fold(params['psi_conv'], params['psi_bias'], *params['bn_psi'])

    bcat = (bg_f + bx_f).reshape(F_int, 1)                 # shared fused bias
    wpsi = wp_f                                            # (1, F_int)
    wt = params['up_weight'][0, 0].astype(jnp.float32)     # (2, 2)
    bt = params['up_bias'][0].astype(jnp.float32)

    # exact 0/1 selection matrices for the otherwise-idle MXU
    dmat = jnp.zeros((Wx, Wg), jnp.float32).at[
        2 * jnp.arange(Wg), jnp.arange(Wg)].set(1.0)       # pick even columns
    ecol = jnp.repeat(jnp.eye(Wg, dtype=jnp.float32), 2, axis=1)   # (Wg, Wx)

    # scalars that ride in SMEM via scalar prefetch
    scal = jnp.stack([bp_f[0], bt, wt[0, 0], wt[0, 1],
                      wt[1, 0], wt[1, 1]]).astype(jnp.float32)

    # g in its native NCHW order but with (H, W) flattened -- a free
    # contiguous reshape that presents the gating data lane-dense per block.
    g2 = g.reshape(N, F_g, Hg * Wg)

    # ---- generation-aware VMEM budget -----------------------------------
    try:
        cap = int(getattr(pltpu.get_tpu_info(), "vmem_capacity_bytes", 0)) \
            or 64 * 1024 * 1024
    except Exception:
        cap = 64 * 1024 * 1024                 # conservative (v7x) fallback
    budget = (3 * cap) // 4                    # ~48 MiB v7x, ~96 MiB v5e/v6e

    xi = x.dtype.itemsize
    gi = g.dtype.itemsize

    def step_bytes(t):
        """VMEM bytes needed for one grid step at row tile t (streams x2 buf,
        resident weights x2 buf, scratch, and f32 kernel temporaries)."""
        x_blk = F_l * 2 * t * Wx * xi                  # x-in block (== out block)
        g_blk = F_g * t * Wg * gi
        streams = 2 * (2 * x_blk + g_blk)              # double-buffered in+out
        weights = 2 * 4 * (F_int * (F_g + F_l + 2) + 2 * Wx * Wg)
        scratch = 4 * (F_l * t * Wg + 2 * t * Wg)
        temps = 4 * (3 * F_int * t * Wg + F_l * Wx + 6 * t * Wx) + x_blk // 2
        return streams + weights + scratch + temps

    def legal(t):
        # BlockSpec (8,128) rule for the g block (last dim t*Wg) and the
        # x/out blocks (2nd-minor dim 2*t), plus divisibility of the grid.
        if t < 1 or Hg % t:
            return False
        if t == Hg:
            return True
        return (t % 8 == 0) and ((t * Wg) % 128 == 0)

    if row_tile is None:
        cands = [t for t in range(1, Hg + 1) if legal(t)]
        # keep the static per-row unroll modest when possible
        small = [t for t in cands if t <= 64] or cands
        fit = [t for t in small if step_bytes(t) <= budget]
        if not fit:
            # TODO(synk): F_l channel-tiling escape hatch for huge F_l*Wx.
            raise ValueError(
                "Attention_block tile does not fit the VMEM budget; stream x "
                "in bf16 or add channel tiling for this stage.")
        th = fit[-1]
        if N == 1:   # keep >=2 grid steps so both v7x TensorCores get work
            two_step = [t for t in fit if Hg // t >= 2]
            if two_step:
                th = two_step[-1]
    else:
        th = row_tile
        assert legal(th), (th, Hg, Wg)

    need = step_bytes(th)
    vmem_limit = int(min(budget, max(32 * 1024 * 1024, need + 4 * 1024 * 1024)))

    grid = (N, Hg // th)

    def full2d(a):
        return pl.BlockSpec(a.shape, lambda n, i, *_: (0, 0))

    out = pl.pallas_call(
        _make_kernel(th, Wg, Wx),
        out_shape=jax.ShapeDtypeStruct((N, F_l, Hx, Wx), x.dtype),
        grid_spec=pltpu.PrefetchScalarGridSpec(
            num_scalar_prefetch=1,
            grid=grid,
            in_specs=[
                pl.BlockSpec((1, F_g, th * Wg), lambda n, i, *_: (n, 0, i)),
                pl.BlockSpec((1, F_l, 2 * th, Wx),
                             lambda n, i, *_: (n, 0, i, 0)),
                full2d(wg_f), full2d(wx_f), full2d(bcat), full2d(wpsi),
                full2d(dmat), full2d(ecol),
            ],
            out_specs=pl.BlockSpec((1, F_l, 2 * th, Wx),
                                   lambda n, i, *_: (n, 0, i, 0)),
            scratch_shapes=[
                pltpu.VMEM((F_l, th * Wg), jnp.float32),
                pltpu.VMEM((2 * th, Wg), jnp.float32),
            ]),
        compiler_params=pltpu.CompilerParams(
            dimension_semantics=("parallel", "parallel"),
            vmem_limit_bytes=vmem_limit),
    )(scal, g2, x, wg_f, wx_f, bcat, wpsi, dmat, ecol)
    return out


def ref_forward(g, x, params):
    """Pure-JAX reference matching the PyTorch forward (eval-mode BN)."""
    eps = 1e-5

    def conv1x1(inp, w, b):
        return jnp.einsum('nchw,oc->nohw', inp, w[:, :, 0, 0]) \
            + b[None, :, None, None]

    def bn(inp, gamma, beta, mean, var):
        s = gamma / jnp.sqrt(var + eps)
        return (inp - mean[None, :, None, None]) * s[None, :, None, None] \
            + beta[None, :, None, None]

    g1 = bn(conv1x1(g, params['wg_conv'], params['wg_bias']), *params['bn_g'])
    x1 = bn(conv1x1(x[:, :, ::2, ::2], params['wx_conv'], params['wx_bias']),
            *params['bn_x'])
    a = jnp.maximum(g1 + x1, 0.0)
    p = jax.nn.sigmoid(
        bn(conv1x1(a, params['psi_conv'], params['psi_bias']),
           *params['bn_psi']))
    wt = params['up_weight'][0, 0]
    bt = params['up_bias'][0]
    N, _, Hg, Wg = p.shape
    up = p[:, :, :, None, :, None] * wt[None, None, None, :, None, :] + bt
    up = up.reshape(N, 1, 2 * Hg, 2 * Wg)
    return x * up


if __name__ == "__main__":
    F_g, F_l, F_int = 4, 4, 8
    N, Hg, Wg = 2, 8, 8
    Hx, Wx = 2 * Hg, 2 * Wg

    keys = jax.random.split(jax.random.PRNGKey(0), 22)
    rn = lambda k, s, sc=0.5: sc * jax.random.normal(k, s, dtype=jnp.float32)
    params = {
        'wg_conv': rn(keys[0], (F_int, F_g, 1, 1)),
        'wg_bias': rn(keys[1], (F_int,)),
        'bn_g': (1.0 + 0.1 * jax.random.normal(keys[2], (F_int,)),
                 rn(keys[3], (F_int,)),
                 0.1 * jax.random.normal(keys[4], (F_int,)),
                 0.5 + jnp.abs(jax.random.normal(keys[5], (F_int,)))),
        'wx_conv': rn(keys[6], (F_int, F_l, 1, 1)),
        'wx_bias': rn(keys[7], (F_int,)),
        'bn_x': (1.0 + 0.1 * jax.random.normal(keys[8], (F_int,)),
                 rn(keys[9], (F_int,)),
                 0.1 * jax.random.normal(keys[10], (F_int,)),
                 0.5 + jnp.abs(jax.random.normal(keys[11], (F_int,)))),
        'psi_conv': rn(keys[12], (1, F_int, 1, 1)),
        'psi_bias': rn(keys[13], (1,)),
        'bn_psi': (1.0 + 0.1 * jax.random.normal(keys[14], (1,)),
                   rn(keys[15], (1,)),
                   0.1 * jax.random.normal(keys[16], (1,)),
                   0.5 + jnp.abs(jax.random.normal(keys[17], (1,)))),
        'up_weight': rn(keys[18], (1, 1, 2, 2)),
        'up_bias': rn(keys[19], (1,)),
    }
    g = jax.random.normal(keys[20], (N, F_g, Hg, Wg), dtype=jnp.float32)
    x = jax.random.normal(keys[21], (N, F_l, Hx, Wx), dtype=jnp.float32)

    ref = ref_forward(g, x, params)

    # fp32 path (exact semantics)
    out = jax.block_until_ready(attention_block_forward(g, x, params))
    assert out.shape == x.shape, (out.shape, x.shape)
    assert out.dtype == x.dtype
    assert jnp.allclose(out, ref, atol=1e-3, rtol=1e-3), \
        float(jnp.max(jnp.abs(out - ref)))

    # bf16 streaming path (halves HBM bytes on the dominant x-in / out
    # streams; note the gating factor itself is then computed from bf16 x).
    out_bf = jax.block_until_ready(
        attention_block_forward(g, x.astype(jnp.bfloat16), params))
    assert out_bf.dtype == jnp.bfloat16
    err_bf = float(jnp.max(jnp.abs(out_bf.astype(jnp.float32) - ref)))
    assert err_bf < 0.15, err_bf

    print("KERNEL_OK")
</pallas_src>

<mosaic_0001>
module attributes {stable_mosaic.version = 11 : i64} {
  func.func @kernel(%arg0: i32, %arg1: i32, %arg2: memref<6xf32, #tpu.memory_space<smem>>, %arg3: memref<1x4x64xf32, #tpu.memory_space<vmem>>, %arg4: memref<1x4x16x16xf32, #tpu.memory_space<vmem>>, %arg5: memref<8x4xf32, #tpu.memory_space<vmem>>, %arg6: memref<8x4xf32, #tpu.memory_space<vmem>>, %arg7: memref<8x1xf32, #tpu.memory_space<vmem>>, %arg8: memref<1x8xf32, #tpu.memory_space<vmem>>, %arg9: memref<16x8xf32, #tpu.memory_space<vmem>>, %arg10: memref<8x16xf32, #tpu.memory_space<vmem>>, %arg11: memref<1x4x16x16xf32, #tpu.memory_space<vmem>>, %arg12: memref<4x64xf32, #tpu.memory_space<vmem>>, %arg13: memref<16x8xf32, #tpu.memory_space<vmem>>) attributes {dimension_semantics = [#tpu.dimension_semantics<parallel>, #tpu.dimension_semantics<parallel>], iteration_bounds = array<i64: 2, 1>, scalar_prefetch = 1 : i64, scratch_operands = 2 : i64, tpu.core_type = #tpu.core_type<tc>, window_params = [{transform_indices = @transform_0, window_bounds = array<i64: 1, 4, 64>}, {transform_indices = @transform_1, window_bounds = array<i64: 1, 4, 16, 16>}, {pipeline_mode = #tpu.pipeline_mode<synchronous>, transform_indices = @transform_2, window_bounds = array<i64: 8, 4>}, {pipeline_mode = #tpu.pipeline_mode<synchronous>, transform_indices = @transform_3, window_bounds = array<i64: 8, 4>}, {pipeline_mode = #tpu.pipeline_mode<synchronous>, transform_indices = @transform_4, window_bounds = array<i64: 8, 1>}, {pipeline_mode = #tpu.pipeline_mode<synchronous>, transform_indices = @transform_5, window_bounds = array<i64: 1, 8>}, {pipeline_mode = #tpu.pipeline_mode<synchronous>, transform_indices = @transform_6, window_bounds = array<i64: 16, 8>}, {pipeline_mode = #tpu.pipeline_mode<synchronous>, transform_indices = @transform_7, window_bounds = array<i64: 8, 16>}, {transform_indices = @transform_8, window_bounds = array<i64: 1, 4, 16, 16>}]} {
    %c0 = arith.constant 0 : index
    %0 = memref.load %arg2[%c0] : memref<6xf32, #tpu.memory_space<smem>>
    %c1 = arith.constant 1 : index
    %1 = memref.load %arg2[%c1] : memref<6xf32, #tpu.memory_space<smem>>
    %c2 = arith.constant 2 : index
    %2 = memref.load %arg2[%c2] : memref<6xf32, #tpu.memory_space<smem>>
    %c3 = arith.constant 3 : index
    %3 = memref.load %arg2[%c3] : memref<6xf32, #tpu.memory_space<smem>>
    %c4 = arith.constant 4 : index
    %4 = memref.load %arg2[%c4] : memref<6xf32, #tpu.memory_space<smem>>
    %c5 = arith.constant 5 : index
    %5 = memref.load %arg2[%c5] : memref<6xf32, #tpu.memory_space<smem>>
    %c0_0 = arith.constant 0 : index
    %c0_1 = arith.constant 0 : index
    %6 = vector.load %arg9[%c0_0, %c0_1] : memref<16x8xf32, #tpu.memory_space<vmem>>, vector<16x8xf32>
    %c0_2 = arith.constant 0 : index
    %c0_3 = arith.constant 0 : index
    %c0_4 = arith.constant 0 : index
    %c0_5 = arith.constant 0 : index
    %7 = vector.load %arg4[%c0_2, %c0_3, %c0_4, %c0_5] : memref<1x4x16x16xf32, #tpu.memory_space<vmem>>, vector<1x4x1x16xf32>
    %8 = vector.shape_cast %7 : vector<1x4x1x16xf32> to vector<4x16xf32>
    %cst = arith.constant dense<0.000000e+00> : vector<4x8xf32>
    %9 = tpu.matmul %8, %6, %cst {dimension_numbers = #tpu.dot_dimension_numbers<[1], [0], [0], [1], [0, 0, 1, 1], [], []>} : vector<4x16xf32>, vector<16x8xf32>, vector<4x8xf32> -> vector<4x8xf32>
    %c0_6 = arith.constant 0 : index
    %c0_7 = arith.constant 0 : index
    %10 = vector.load %arg12[%c0_6, %c0_7] : memref<4x64xf32, #tpu.memory_space<vmem>>, vector<4x8xf32>
    tpu.vector_store %arg12[%c0_6, %c0_7], %9 {strides = array<i32>} : memref<4x64xf32, #tpu.memory_space<vmem>>, vector<4x8xf32>,
    %c0_8 = arith.constant 0 : index
    %c0_9 = arith.constant 0 : index
    %c2_10 = arith.constant 2 : index
    %c0_11 = arith.constant 0 : index
    %11 = vector.load %arg4[%c0_8, %c0_9, %c2_10, %c0_11] : memref<1x4x16x16xf32, #tpu.memory_space<vmem>>, vector<1x4x1x16xf32>
    %12 = vector.shape_cast %11 : vector<1x4x1x16xf32> to vector<4x16xf32>
    %cst_12 = arith.constant dense<0.000000e+00> : vector<4x8xf32>
    %13 = tpu.matmul %12, %6, %cst_12 {dimension_numbers = #tpu.dot_dimension_numbers<[1], [0], [0], [1], [0, 0, 1, 1], [], []>} : vector<4x16xf32>, vector<16x8xf32>, vector<4x8xf32> -> vector<4x8xf32>
    %c0_13 = arith.constant 0 : index
    %c8 = arith.constant 8 : index
    %14 = vector.load %arg12[%c0_13, %c8] : memref<4x64xf32, #tpu.memory_space<vmem>>, vector<4x8xf32>
    tpu.vector_store %arg12[%c0_13, %c8], %13 {strides = array<i32>} : memref<4x64xf32, #tpu.memory_space<vmem>>, vector<4x8xf32>,
    %c0_14 = arith.constant 0 : index
    %c0_15 = arith.constant 0 : index
    %c4_16 = arith.constant 4 : index
    %c0_17 = arith.constant 0 : index
    %15 = vector.load %arg4[%c0_14, %c0_15, %c4_16, %c0_17] : memref<1x4x16x16xf32, #tpu.memory_space<vmem>>, vector<1x4x1x16xf32>
    %16 = vector.shape_cast %15 : vector<1x4x1x16xf32> to vector<4x16xf32>
    %cst_18 = arith.constant dense<0.000000e+00> : vector<4x8xf32>
    %17 = tpu.matmul %16, %6, %cst_18 {dimension_numbers = #tpu.dot_dimension_numbers<[1], [0], [0], [1], [0, 0, 1, 1], [], []>} : vector<4x16xf32>, vector<16x8xf32>, vector<4x8xf32> -> vector<4x8xf32>
    %c0_19 = arith.constant 0 : index
    %c16 = arith.constant 16 : index
    %18 = vector.load %arg12[%c0_19, %c16] : memref<4x64xf32, #tpu.memory_space<vmem>>, vector<4x8xf32>
    tpu.vector_store %arg12[%c0_19, %c16], %17 {strides = array<i32>} : memref<4x64xf32, #tpu.memory_space<vmem>>, vector<4x8xf32>,
    %c0_20 = arith.constant 0 : index
    %c0_21 = arith.constant 0 : index
    %c6 = arith.constant 6 : index
    %c0_22 = arith.constant 0 : index
    %19 = vector.load %arg4[%c0_20, %c0_21, %c6, %c0_22] : memref<1x4x16x16xf32, #tpu.memory_space<vmem>>, vector<1x4x1x16xf32>
    %20 = vector.shape_cast %19 : vector<1x4x1x16xf32> to vector<4x16xf32>
    %cst_23 = arith.constant dense<0.000000e+00> : vector<4x8xf32>
    %21 = tpu.matmul %20, %6, %cst_23 {dimension_numbers = #tpu.dot_dimension_numbers<[1], [0], [0], [1], [0, 0, 1, 1], [], []>} : vector<4x16xf32>, vector<16x8xf32>, vector<4x8xf32> -> vector<4x8xf32>
    %c0_24 = arith.constant 0 : index
    %c24 = arith.constant 24 : index
    %22 = vector.load %arg12[%c0_24, %c24] : memref<4x64xf32, #tpu.memory_space<vmem>>, vector<4x8xf32>
    tpu.vector_store %arg12[%c0_24, %c24], %21 {strides = array<i32>} : memref<4x64xf32, #tpu.memory_space<vmem>>, vector<4x8xf32>,
    %c0_25 = arith.constant 0 : index
    %c0_26 = arith.constant 0 : index
    %c8_27 = arith.constant 8 : index
    %c0_28 = arith.constant 0 : index
    %23 = vector.load %arg4[%c0_25, %c0_26, %c8_27, %c0_28] : memref<1x4x16x16xf32, #tpu.memory_space<vmem>>, vector<1x4x1x16xf32>
    %24 = vector.shape_cast %23 : vector<1x4x1x16xf32> to vector<4x16xf32>
    %cst_29 = arith.constant dense<0.000000e+00> : vector<4x8xf32>
    %25 = tpu.matmul %24, %6, %cst_29 {dimension_numbers = #tpu.dot_dimension_numbers<[1], [0], [0], [1], [0, 0, 1, 1], [], []>} : vector<4x16xf32>, vector<16x8xf32>, vector<4x8xf32> -> vector<4x8xf32>
    %c0_30 = arith.constant 0 : index
    %c32 = arith.constant 32 : index
    %26 = vector.load %arg12[%c0_30, %c32] : memref<4x64xf32, #tpu.memory_space<vmem>>, vector<4x8xf32>
    tpu.vector_store %arg12[%c0_30, %c32], %25 {strides = array<i32>} : memref<4x64xf32, #tpu.memory_space<vmem>>, vector<4x8xf32>,
    %c0_31 = arith.constant 0 : index
    %c0_32 = arith.constant 0 : index
    %c10 = arith.constant 10 : index
    %c0_33 = arith.constant 0 : index
    %27 = vector.load %arg4[%c0_31, %c0_32, %c10, %c0_33] : memref<1x4x16x16xf32, #tpu.memory_space<vmem>>, vector<1x4x1x16xf32>
    %28 = vector.shape_cast %27 : vector<1x4x1x16xf32> to vector<4x16xf32>
    %cst_34 = arith.constant dense<0.000000e+00> : vector<4x8xf32>
    %29 = tpu.matmul %28, %6, %cst_34 {dimension_numbers = #tpu.dot_dimension_numbers<[1], [0], [0], [1], [0, 0, 1, 1], [], []>} : vector<4x16xf32>, vector<16x8xf32>, vector<4x8xf32> -> vector<4x8xf32>
    %c0_35 = arith.constant 0 : index
    %c40 = arith.constant 40 : index
    %30 = vector.load %arg12[%c0_35, %c40] : memref<4x64xf32, #tpu.memory_space<vmem>>, vector<4x8xf32>
    tpu.vector_store %arg12[%c0_35, %c40], %29 {strides = array<i32>} : memref<4x64xf32, #tpu.memory_space<vmem>>, vector<4x8xf32>,
    %c0_36 = arith.constant 0 : index
    %c0_37 = arith.constant 0 : index
    %c12 = arith.constant 12 : index
    %c0_38 = arith.constant 0 : index
    %31 = vector.load %arg4[%c0_36, %c0_37, %c12, %c0_38] : memref<1x4x16x16xf32, #tpu.memory_space<vmem>>, vector<1x4x1x16xf32>
    %32 = vector.shape_cast %31 : vector<1x4x1x16xf32> to vector<4x16xf32>
    %cst_39 = arith.constant dense<0.000000e+00> : vector<4x8xf32>
    %33 = tpu.matmul %32, %6, %cst_39 {dimension_numbers = #tpu.dot_dimension_numbers<[1], [0], [0], [1], [0, 0, 1, 1], [], []>} : vector<4x16xf32>, vector<16x8xf32>, vector<4x8xf32> -> vector<4x8xf32>
    %c0_40 = arith.constant 0 : index
    %c48 = arith.constant 48 : index
    %34 = vector.load %arg12[%c0_40, %c48] : memref<4x64xf32, #tpu.memory_space<vmem>>, vector<4x8xf32>
    tpu.vector_store %arg12[%c0_40, %c48], %33 {strides = array<i32>} : memref<4x64xf32, #tpu.memory_space<vmem>>, vector<4x8xf32>,
    %c0_41 = arith.constant 0 : index
    %c0_42 = arith.constant 0 : index
    %c14 = arith.constant 14 : index
    %c0_43 = arith.constant 0 : index
    %35 = vector.load %arg4[%c0_41, %c0_42, %c14, %c0_43] : memref<1x4x16x16xf32, #tpu.memory_space<vmem>>, vector<1x4x1x16xf32>
    %36 = vector.shape_cast %35 : vector<1x4x1x16xf32> to vector<4x16xf32>
    %cst_44 = arith.constant dense<0.000000e+00> : vector<4x8xf32>
    %37 = tpu.matmul %36, %6, %cst_44 {dimension_numbers = #tpu.dot_dimension_numbers<[1], [0], [0], [1], [0, 0, 1, 1], [], []>} : vector<4x16xf32>, vector<16x8xf32>, vector<4x8xf32> -> vector<4x8xf32>
    %c0_45 = arith.constant 0 : index
    %c56 = arith.constant 56 : index
    %38 = vector.load %arg12[%c0_45, %c56] : memref<4x64xf32, #tpu.memory_space<vmem>>, vector<4x8xf32>
    tpu.vector_store %arg12[%c0_45, %c56], %37 {strides = array<i32>} : memref<4x64xf32, #tpu.memory_space<vmem>>, vector<4x8xf32>,
    %c0_46 = arith.constant 0 : index
    %c0_47 = arith.constant 0 : index
    %39 = vector.load %arg5[%c0_46, %c0_47] : memref<8x4xf32, #tpu.memory_space<vmem>>, vector<8x4xf32>
    %c0_48 = arith.constant 0 : index
    %c0_49 = arith.constant 0 : index
    %c0_50 = arith.constant 0 : index
    %40 = vector.load %arg3[%c0_48, %c0_49, %c0_50] : memref<1x4x64xf32, #tpu.memory_space<vmem>>, vector<1x4x64xf32>
    %41 = vector.shape_cast %40 : vector<1x4x64xf32> to vector<4x64xf32>
    %cst_51 = arith.constant dense<0.000000e+00> : vector<8x64xf32>
    %42 = tpu.matmul %39, %41, %cst_51 {dimension_numbers = #tpu.dot_dimension_numbers<[1], [0], [0], [1], [0, 0, 1, 1], [], []>} : vector<8x4xf32>, vector<4x64xf32>, vector<8x64xf32> -> vector<8x64xf32>
    %c0_52 = arith.constant 0 : index
    %c0_53 = arith.constant 0 : index
    %43 = vector.load %arg6[%c0_52, %c0_53] : memref<8x4xf32, #tpu.memory_space<vmem>>, vector<8x4xf32>
    %c0_54 = arith.constant 0 : index
    %c0_55 = arith.constant 0 : index
    %44 = vector.load %arg12[%c0_54, %c0_55] : memref<4x64xf32, #tpu.memory_space<vmem>>, vector<4x64xf32>
    %cst_56 = arith.constant dense<0.000000e+00> : vector<8x64xf32>
    %45 = tpu.matmul %43, %44, %cst_56 {dimension_numbers = #tpu.dot_dimension_numbers<[1], [0], [0], [1], [0, 0, 1, 1], [], []>} : vector<8x4xf32>, vector<4x64xf32>, vector<8x64xf32> -> vector<8x64xf32>
    %46 = arith.addf %42, %45 : vector<8x64xf32>
    %c0_57 = arith.constant 0 : index
    %c0_58 = arith.constant 0 : index
    %47 = vector.load %arg7[%c0_57, %c0_58] : memref<8x1xf32, #tpu.memory_space<vmem>>, vector<8x1xf32>
    %48 = vector.broadcast %47 : vector<8x1xf32> to vector<8x64xf32>
    %49 = arith.addf %46, %48 : vector<8x64xf32>
    %cst_59 = arith.constant 0.000000e+00 : f32
    %50 = vector.broadcast %cst_59 : f32 to vector<8x64xf32>
    %51 = arith.maximumf %49, %50 : vector<8x64xf32>
    %c0_60 = arith.constant 0 : index
    %c0_61 = arith.constant 0 : index
    %52 = vector.load %arg8[%c0_60, %c0_61] : memref<1x8xf32, #tpu.memory_space<vmem>>, vector<1x8xf32>
    %cst_62 = arith.constant dense<0.000000e+00> : vector<1x64xf32>
    %53 = tpu.matmul %52, %51, %cst_62 {dimension_numbers = #tpu.dot_dimension_numbers<[1], [0], [0], [1], [0, 0, 1, 1], [], []>} : vector<1x8xf32>, vector<8x64xf32>, vector<1x64xf32> -> vector<1x64xf32>
    %54 = vector.broadcast %0 : f32 to vector<1x64xf32>
    %55 = arith.addf %53, %54 : vector<1x64xf32>
    %56 = arith.negf %55 : vector<1x64xf32>
    %57 = math.exp %56 : vector<1x64xf32>
    %cst_63 = arith.constant 1.000000e+00 : f32
    %58 = vector.broadcast %cst_63 : f32 to vector<1x64xf32>
    %59 = arith.addf %58, %57 : vector<1x64xf32>
    %60 = arith.divf %58, %59 : vector<1x64xf32>
    %61 = vector.extract_strided_slice %60 {offsets = [0, 0], sizes = [1, 8], strides = [1, 1]} : vector<1x64xf32> to vector<1x8xf32>
    %c0_64 = arith.constant 0 : index
    %c0_65 = arith.constant 0 : index
    %62 = vector.load %arg13[%c0_64, %c0_65] : memref<16x8xf32, #tpu.memory_space<vmem>>, vector<1x8xf32>
    tpu.vector_store %arg13[%c0_64, %c0_65], %61 {strides = array<i32>} : memref<16x8xf32, #tpu.memory_space<vmem>>, vector<1x8xf32>,
    %c1_66 = arith.constant 1 : index
    %c0_67 = arith.constant 0 : index
    %63 = vector.load %arg13[%c1_66, %c0_67] : memref<16x8xf32, #tpu.memory_space<vmem>>, vector<1x8xf32>
    tpu.vector_store %arg13[%c1_66, %c0_67], %61 {strides = array<i32>} : memref<16x8xf32, #tpu.memory_space<vmem>>, vector<1x8xf32>,
    %64 = vector.extract_strided_slice %60 {offsets = [0, 8], sizes = [1, 8], strides = [1, 1]} : vector<1x64xf32> to vector<1x8xf32>
    %c2_68 = arith.constant 2 : index
    %c0_69 = arith.constant 0 : index
    %65 = vector.load %arg13[%c2_68, %c0_69] : memref<16x8xf32, #tpu.memory_space<vmem>>, vector<1x8xf32>
    tpu.vector_store %arg13[%c2_68, %c0_69], %64 {strides = array<i32>} : memref<16x8xf32, #tpu.memory_space<vmem>>, vector<1x8xf32>,
    %c3_70 = arith.constant 3 : index
    %c0_71 = arith.constant 0 : index
    %66 = vector.load %arg13[%c3_70, %c0_71] : memref<16x8xf32, #tpu.memory_space<vmem>>, vector<1x8xf32>
    tpu.vector_store %arg13[%c3_70, %c0_71], %64 {strides = array<i32>} : memref<16x8xf32, #tpu.memory_space<vmem>>, vector<1x8xf32>,
    %67 = vector.extract_strided_slice %60 {offsets = [0, 16], sizes = [1, 8], strides = [1, 1]} : vector<1x64xf32> to vector<1x8xf32>
    %c4_72 = arith.constant 4 : index
    %c0_73 = arith.constant 0 : index
    %68 = vector.load %arg13[%c4_72, %c0_73] : memref<16x8xf32, #tpu.memory_space<vmem>>, vector<1x8xf32>
    tpu.vector_store %arg13[%c4_72, %c0_73], %67 {strides = array<i32>} : memref<16x8xf32, #tpu.memory_space<vmem>>, vector<1x8xf32>,
    %c5_74 = arith.constant 5 : index
    %c0_75 = arith.constant 0 : index
    %69 = vector.load %arg13[%c5_74, %c0_75] : memref<16x8xf32, #tpu.memory_space<vmem>>, vector<1x8xf32>
    tpu.vector_store %arg13[%c5_74, %c0_75], %67 {strides = array<i32>} : memref<16x8xf32, #tpu.memory_space<vmem>>, vector<1x8xf32>,
    %70 = vector.extract_strided_slice %60 {offsets = [0, 24], sizes = [1, 8], strides = [1, 1]} : vector<1x64xf32> to vector<1x8xf32>
    %c6_76 = arith.constant 6 : index
    %c0_77 = arith.constant 0 : index
    %71 = vector.load %arg13[%c6_76, %c0_77] : memref<16x8xf32, #tpu.memory_space<vmem>>, vector<1x8xf32>
    tpu.vector_store %arg13[%c6_76, %c0_77], %70 {strides = array<i32>} : memref<16x8xf32, #tpu.memory_space<vmem>>, vector<1x8xf32>,
    %c7 = arith.constant 7 : index
    %c0_78 = arith.constant 0 : index
    %72 = vector.load %arg13[%c7, %c0_78] : memref<16x8xf32, #tpu.memory_space<vmem>>, vector<1x8xf32>
    tpu.vector_store %arg13[%c7, %c0_78], %70 {strides = array<i32>} : memref<16x8xf32, #tpu.memory_space<vmem>>, vector<1x8xf32>,
    %73 = vector.extract_strided_slice %60 {offsets = [0, 32], sizes = [1, 8], strides = [1, 1]} : vector<1x64xf32> to vector<1x8xf32>
    %c8_79 = arith.constant 8 : index
    %c0_80 = arith.constant 0 : index
    %74 = vector.load %arg13[%c8_79, %c0_80] : memref<16x8xf32, #tpu.memory_space<vmem>>, vector<1x8xf32>
    tpu.vector_store %arg13[%c8_79, %c0_80], %73 {strides = array<i32>} : memref<16x8xf32, #tpu.memory_space<vmem>>, vector<1x8xf32>,
    %c9 = arith.constant 9 : index
    %c0_81 = arith.constant 0 : index
    %75 = vector.load %arg13[%c9, %c0_81] : memref<16x8xf32, #tpu.memory_space<vmem>>, vector<1x8xf32>
    tpu.vector_store %arg13[%c9, %c0_81], %73 {strides = array<i32>} : memref<16x8xf32, #tpu.memory_space<vmem>>, vector<1x8xf32>,
    %76 = vector.extract_strided_slice %60 {offsets = [0, 40], sizes = [1, 8], strides = [1, 1]} : vector<1x64xf32> to vector<1x8xf32>
    %c10_82 = arith.constant 10 : index
    %c0_83 = arith.constant 0 : index
    %77 = vector.load %arg13[%c10_82, %c0_83] : memref<16x8xf32, #tpu.memory_space<vmem>>, vector<1x8xf32>
    tpu.vector_store %arg13[%c10_82, %c0_83], %76 {strides = array<i32>} : memref<16x8xf32, #tpu.memory_space<vmem>>, vector<1x8xf32>,
    %c11 = arith.constant 11 : index
    %c0_84 = arith.constant 0 : index
    %78 = vector.load %arg13[%c11, %c0_84] : memref<16x8xf32, #tpu.memory_space<vmem>>, vector<1x8xf32>
    tpu.vector_store %arg13[%c11, %c0_84], %76 {strides = array<i32>} : memref<16x8xf32, #tpu.memory_space<vmem>>, vector<1x8xf32>,
    %79 = vector.extract_strided_slice %60 {offsets = [0, 48], sizes = [1, 8], strides = [1, 1]} : vector<1x64xf32> to vector<1x8xf32>
    %c12_85 = arith.constant 12 : index
    %c0_86 = arith.constant 0 : index
    %80 = vector.load %arg13[%c12_85, %c0_86] : memref<16x8xf32, #tpu.memory_space<vmem>>, vector<1x8xf32>
    tpu.vector_store %arg13[%c12_85, %c0_86], %79 {strides = array<i32>} : memref<16x8xf32, #tpu.memory_space<vmem>>, vector<1x8xf32>,
    %c13 = arith.constant 13 : index
    %c0_87 = arith.constant 0 : index
    %81 = vector.load %arg13[%c13, %c0_87] : memref<16x8xf32, #tpu.memory_space<vmem>>, vector<1x8xf32>
    tpu.vector_store %arg13[%c13, %c0_87], %79 {strides = array<i32>} : memref<16x8xf32, #tpu.memory_space<vmem>>, vector<1x8xf32>,
    %82 = vector.extract_strided_slice %60 {offsets = [0, 56], sizes = [1, 8], strides = [1, 1]} : vector<1x64xf32> to vector<1x8xf32>
    %c14_88 = arith.constant 14 : index
    %c0_89 = arith.constant 0 : index
    %83 = vector.load %arg13[%c14_88, %c0_89] : memref<16x8xf32, #tpu.memory_space<vmem>>, vector<1x8xf32>
    tpu.vector_store %arg13[%c14_88, %c0_89], %82 {strides = array<i32>} : memref<16x8xf32, #tpu.memory_space<vmem>>, vector<1x8xf32>,
    %c15 = arith.constant 15 : index
    %c0_90 = arith.constant 0 : index
    %84 = vector.load %arg13[%c15, %c0_90] : memref<16x8xf32, #tpu.memory_space<vmem>>, vector<1x8xf32>
    tpu.vector_store %arg13[%c15, %c0_90], %82 {strides = array<i32>} : memref<16x8xf32, #tpu.memory_space<vmem>>, vector<1x8xf32>,
    %c0_91 = arith.constant 0 : index
    %c0_92 = arith.constant 0 : index
    %85 = vector.load %arg13[%c0_91, %c0_92] : memref<16x8xf32, #tpu.memory_space<vmem>>, vector<16x8xf32>
    %c0_93 = arith.constant 0 : index
    %c0_94 = arith.constant 0 : index
    %86 = vector.load %arg10[%c0_93, %c0_94] : memref<8x16xf32, #tpu.memory_space<vmem>>, vector<8x16xf32>
    %cst_95 = arith.constant dense<0.000000e+00> : vector<16x16xf32>
    %87 = tpu.matmul %85, %86, %cst_95 {dimension_numbers = #tpu.dot_dimension_numbers<[1], [0], [0], [1], [0, 0, 1, 1], [], []>} : vector<16x8xf32>, vector<8x16xf32>, vector<16x16xf32> -> vector<16x16xf32>
    %88 = tpu.iota {dimensions = array<i32: 0>} : vector<16x16xi32>
    %c2_i32 = arith.constant 2 : i32
    %c0_i32 = arith.constant 0 : i32
    %89 = arith.cmpi eq, %c2_i32, %c0_i32 : i32
    %c1_i32 = arith.constant 1 : i32
    %90 = arith.select %89, %c1_i32, %c2_i32 : i32
    %91 = vector.broadcast %90 : i32 to vector<16x16xi32>
    %92 = arith.remsi %88, %91 : vector<16x16xi32>
    %c0_i32_96 = arith.constant 0 : i32
    %93 = vector.broadcast %c0_i32_96 : i32 to vector<16x16xi32>
    %94 = arith.cmpi ne, %92, %93 : vector<16x16xi32>
    %c0_i32_97 = arith.constant 0 : i32
    %95 = vector.broadcast %c0_i32_97 : i32 to vector<16x16xi32>
    %96 = arith.cmpi slt, %92, %95 : vector<16x16xi32>
    %c0_i32_98 = arith.constant 0 : i32
    %97 = arith.cmpi slt, %90, %c0_i32_98 : i32
    %98 = vector.broadcast %97 : i1 to vector<16x16xi1>
    %99 = vector.broadcast %98 : vector<16x16xi1> to vector<16x16xi1>
    %100 = arith.xori %96, %99 : vector<16x16xi1>
    %101 = arith.andi %100, %94 : vector<16x16xi1>
    %102 = vector.broadcast %90 : i32 to vector<16x16xi32>
    %103 = arith.addi %92, %102 : vector<16x16xi32>
    %104 = arith.select %101, %103, %92 : vector<16x16xi1>, vector<16x16xi32>
    %105 = tpu.iota {dimensions = array<i32: 1>} : vector<16x16xi32>
    %c2_i32_99 = arith.constant 2 : i32
    %c0_i32_100 = arith.constant 0 : i32
    %106 = arith.cmpi eq, %c2_i32_99, %c0_i32_100 : i32
    %c1_i32_101 = arith.constant 1 : i32
    %107 = arith.select %106, %c1_i32_101, %c2_i32_99 : i32
    %108 = vector.broadcast %107 : i32 to vector<16x16xi32>
    %109 = arith.remsi %105, %108 : vector<16x16xi32>
    %c0_i32_102 = arith.constant 0 : i32
    %110 = vector.broadcast %c0_i32_102 : i32 to vector<16x16xi32>
    %111 = arith.cmpi ne, %109, %110 : vector<16x16xi32>
    %c0_i32_103 = arith.constant 0 : i32
    %112 = vector.broadcast %c0_i32_103 : i32 to vector<16x16xi32>
    %113 = arith.cmpi slt, %109, %112 : vector<16x16xi32>
    %c0_i32_104 = arith.constant 0 : i32
    %114 = arith.cmpi slt, %107, %c0_i32_104 : i32
    %115 = vector.broadcast %114 : i1 to vector<16x16xi1>
    %116 = vector.broadcast %115 : vector<16x16xi1> to vector<16x16xi1>
    %117 = arith.xori %113, %116 : vector<16x16xi1>
    %118 = arith.andi %117, %111 : vector<16x16xi1>
    %119 = vector.broadcast %107 : i32 to vector<16x16xi32>
    %120 = arith.addi %109, %119 : vector<16x16xi32>
    %121 = arith.select %118, %120, %109 : vector<16x16xi1>, vector<16x16xi32>
    %c0_i32_105 = arith.constant 0 : i32
    %122 = vector.broadcast %c0_i32_105 : i32 to vector<16x16xi32>
    %123 = arith.cmpi eq, %104, %122 : vector<16x16xi32>
    %c0_i32_106 = arith.constant 0 : i32
    %124 = vector.broadcast %c0_i32_106 : i32 to vector<16x16xi32>
    %125 = arith.cmpi eq, %121, %124 : vector<16x16xi32>
    %126 = vector.broadcast %2 : f32 to vector<16x16xf32>
    %127 = vector.broadcast %3 : f32 to vector<16x16xf32>
    %128 = arith.select %125, %126, %127 : vector<16x16xi1>, vector<16x16xf32>
    %c0_i32_107 = arith.constant 0 : i32
    %129 = vector.broadcast %c0_i32_107 : i32 to vector<16x16xi32>
    %130 = arith.cmpi eq, %121, %129 : vector<16x16xi32>
    %131 = vector.broadcast %4 : f32 to vector<16x16xf32>
    %132 = vector.broadcast %5 : f32 to vector<16x16xf32>
    %133 = arith.select %130, %131, %132 : vector<16x16xi1>, vector<16x16xf32>
    %134 = arith.select %123, %128, %133 : vector<16x16xi1>, vector<16x16xf32>
    %135 = arith.mulf %87, %134 : vector<16x16xf32>
    %136 = vector.broadcast %1 : f32 to vector<16x16xf32>
    %137 = arith.addf %135, %136 : vector<16x16xf32>
    %c0_108 = arith.constant 0 : index
    %c0_109 = arith.constant 0 : index
    %c0_110 = arith.constant 0 : index
    %c0_111 = arith.constant 0 : index
    %138 = vector.load %arg4[%c0_108, %c0_109, %c0_110, %c0_111] : memref<1x4x16x16xf32, #tpu.memory_space<vmem>>, vector<1x4x16x16xf32>
    %139 = vector.shape_cast %138 : vector<1x4x16x16xf32> to vector<4x16x16xf32>
    %140 = vector.shape_cast %137 : vector<16x16xf32> to vector<1x16x16xf32>
    %141 = vector.broadcast %140 : vector<1x16x16xf32> to vector<4x16x16xf32>
    %142 = arith.mulf %139, %141 : vector<4x16x16xf32>
    %c0_112 = arith.constant 0 : index
    %c0_113 = arith.constant 0 : index
    %c0_114 = arith.constant 0 : index
    %c0_115 = arith.constant 0 : index
    %143 = vector.load %arg11[%c0_112, %c0_113, %c0_114, %c0_115] : memref<1x4x16x16xf32, #tpu.memory_space<vmem>>, vector<1x4x16x16xf32>
    %144 = vector.shape_cast %143 : vector<1x4x16x16xf32> to vector<4x16x16xf32>
    %145 = vector.shape_cast %142 : vector<4x16x16xf32> to vector<1x4x16x16xf32>
    tpu.vector_store %arg11[%c0_112, %c0_113, %c0_114, %c0_115], %145 {strides = array<i32>} : memref<1x4x16x16xf32, #tpu.memory_space<vmem>>, vector<1x4x16x16xf32>,
    return
  }
  func.func @transform_0(%arg0: i32, %arg1: i32, %arg2: memref<6xf32, #tpu.memory_space<smem>>) -> (i32, i32, i32) {
    %c0_i32 = arith.constant 0 : i32
    %c0_i32_0 = arith.constant 0 : i32
    return %arg0, %c0_i32, %arg1 : i32, i32, i32
  }
  func.func @transform_1(%arg0: i32, %arg1: i32, %arg2: memref<6xf32, #tpu.memory_space<smem>>) -> (i32, i32, i32, i32) {
    %c0_i32 = arith.constant 0 : i32
    %c0_i32_0 = arith.constant 0 : i32
    %c0_i32_1 = arith.constant 0 : i32
    return %arg0, %c0_i32, %arg1, %c0_i32_0 : i32, i32, i32, i32
  }
  func.func @transform_2(%arg0: i32, %arg1: i32, %arg2: memref<6xf32, #tpu.memory_space<smem>>) -> (i32, i32) {
    %c0_i32 = arith.constant 0 : i32
    %c0_i32_0 = arith.constant 0 : i32
    %c0_i32_1 = arith.constant 0 : i32
    return %c0_i32, %c0_i32_0 : i32, i32
  }
  func.func @transform_3(%arg0: i32, %arg1: i32, %arg2: memref<6xf32, #tpu.memory_space<smem>>) -> (i32, i32) {
    %c0_i32 = arith.constant 0 : i32
    %c0_i32_0 = arith.constant 0 : i32
    %c0_i32_1 = arith.constant 0 : i32
    return %c0_i32, %c0_i32_0 : i32, i32
  }
  func.func @transform_4(%arg0: i32, %arg1: i32, %arg2: memref<6xf32, #tpu.memory_space<smem>>) -> (i32, i32) {
    %c0_i32 = arith.constant 0 : i32
    %c0_i32_0 = arith.constant 0 : i32
    %c0_i32_1 = arith.constant 0 : i32
    return %c0_i32, %c0_i32_0 : i32, i32
  }
  func.func @transform_5(%arg0: i32, %arg1: i32, %arg2: memref<6xf32, #tpu.memory_space<smem>>) -> (i32, i32) {
    %c0_i32 = arith.constant 0 : i32
    %c0_i32_0 = arith.constant 0 : i32
    %c0_i32_1 = arith.constant 0 : i32
    return %c0_i32, %c0_i32_0 : i32, i32
  }
  func.func @transform_6(%arg0: i32, %arg1: i32, %arg2: memref<6xf32, #tpu.memory_space<smem>>) -> (i32, i32) {
    %c0_i32 = arith.constant 0 : i32
    %c0_i32_0 = arith.constant 0 : i32
    %c0_i32_1 = arith.constant 0 : i32
    return %c0_i32, %c0_i32_0 : i32, i32
  }
  func.func @transform_7(%arg0: i32, %arg1: i32, %arg2: memref<6xf32, #tpu.memory_space<smem>>) -> (i32, i32) {
    %c0_i32 = arith.constant 0 : i32
    %c0_i32_0 = arith.constant 0 : i32
    %c0_i32_1 = arith.constant 0 : i32
    return %c0_i32, %c0_i32_0 : i32, i32
  }
  func.func @transform_8(%arg0: i32, %arg1: i32, %arg2: memref<6xf32, #tpu.memory_space<smem>>) -> (i32, i32, i32, i32) {
    %c0_i32 = arith.constant 0 : i32
    %c0_i32_0 = arith.constant 0 : i32
    %c0_i32_1 = arith.constant 0 : i32
    return %arg0, %c0_i32, %arg1, %c0_i32_0 : i32, i32, i32, i32
  }
}

</mosaic_0001>

<llo_original>
// kernel: tpu_custom_call.1
$region0: #{tpu_custom_call.1}
  #allocation0 [shape = 'u32[]', space=smem, size = 0x4, offset = 0x4, fixed_abs, tag = 'smem constant byte address 0x4 - core index']
  #allocation1 [shape = 'u32[144,128]{1,0:T(1,128)}', space=vmem, size = 0x12000, scoped, tag = 'internal scratch']
  #allocation2 [shape = 'f32[4,64]{1,0:T(4,128)}', space=vmem, size = 0x800, scoped, tag = 'scratch operand']
  #allocation3 [shape = 'f32[16,8]{1,0:T(8,128)}', space=vmem, size = 0x2000, scoped, tag = 'scratch operand']
  #allocation4 [shape = 's32[1]{0}', space=sflag, size = 0x4, scoped, tag = 'scoped memory for tpu_custom_call.1']
  #allocation5 [shape = 'u8[512]{0}', space=smem, size = 0x200, scoped, tag = 'prefetched SMEM operand 0']
  %s0 = inlined_call_operand.vmem [shape: f32[6], index: 0, kind: input, shape index: {}]
  %s1 = inlined_call_operand.vmem [shape: f32[2,4,64], index: 1, kind: input, shape index: {}]
  %s2 = inlined_call_operand.hbm [shape: f32[2,4,16,16], index: 2, kind: input, shape index: {}]
  %s3 = inlined_call_operand.vmem [shape: f32[8,4], index: 3, kind: input, shape index: {}]
  %s4 = inlined_call_operand.vmem [shape: f32[8,4], index: 4, kind: input, shape index: {}]
  %s5 = inlined_call_operand.vmem [shape: f32[8,1], index: 5, kind: input, shape index: {}]
  %s6 = inlined_call_operand.vmem [shape: f32[1,8], index: 6, kind: input, shape index: {}]
  %s7 = inlined_call_operand.vmem [shape: f32[16,8], index: 7, kind: input, shape index: {}]
  %s8 = inlined_call_operand.vmem [shape: f32[8,16], index: 8, kind: input, shape index: {}]
  %s9 = inlined_call_operand.hbm [shape: f32[2,4,16,16], index: 9, kind: output, shape index: {}]
  %s10 = sld [smem:[#allocation0]]
  $region69: #{tpu_custom_call.1} parent=0
    _
  %s12 = ssub.s32 1, %s10
  %s13 = scalar_select 0, %s12, %s10
  %s14 = sshll.u32 %s0, 4
  %s15 = int_to_ptr.vmem [resolvable:$true] %s14
  %17 = dma.vmem_to_smem %s15, 16, [#allocation5], [#allocation4]
  %18 = dma.done [#allocation4], 16
  %19 = sfence
  $region1: #{tpu_custom_call.1} parent=0
    #allocation6 [shape = 'u8[65536]{0}', space=vmem, size = 0x10000, scoped, tag = 'input window, operand 2']
    #allocation7 [shape = 's32[2]{0}', space=sflag, size = 0x8, scoped, tag = 'scoped memory for tpu_custom_call.1']
    #allocation8 [shape = 's32[2]{0}', space=sflag, size = 0x8, scoped, tag = 'scoped memory for tpu_custom_call.1']
    #allocation9 [shape = 'u8[65536]{0}', space=vmem, size = 0x10000, scoped, tag = 'output window, operand 0']
    %20 = vsyncpa [#allocation7], 0
    %s21 = scalar_lea.sflag [#allocation7], 1
    %22 = vsyncpa %s21, 0
    %23 = vsyncpa [#allocation8], 0
    %s24 = scalar_lea.sflag [#allocation8], 1
    %25 = vsyncpa %s24, 0
    loop: start=0, step=1, limit=4
    $region2: #{tpu_custom_call.1} parent=1 // loop_pre_header
      _
    $region3: #{tpu_custom_call.1} parent=1 // loop_header
      %s27 = sphi 0, %s31
      %p28 = scmp.ge.s32.totalorder %s27, 4
      %s34 = sphi 0, %s46
      %s35 = sphi 0, %s42
      %s36 = sphi 0, %s34
      %s37 = sphi 0, %s35
      %s38 = sphi 0, %s36
      %s39 = sphi 0, %s37
      %s51 = sphi 0, %s53
      %s54 = sphi 0, %s51
      %s55 = sphi 0, %s54
      %s71 = sphi 0, %s55
      %s79 = sphi 0, %s81
      %s82 = sphi 0, %s79
      %s83 = sphi 0, %s82
      %s99 = sphi 0, %s83
      %s103 = sphi 0, %s103
      %s105 = sphi 0, %s103
      %s106 = sphi 0, %s105
      %s120 = sphi 0, %s106
      %s124 = sphi 0, %s124
      %s126 = sphi 0, %s124
      %s127 = sphi 0, %s126
      %s141 = sphi 0, %s127
      %s145 = sphi 0, %s145
      %s147 = sphi 0, %s145
      %s148 = sphi 0, %s147
      %s162 = sphi 0, %s148
      %s166 = sphi 0, %s166
      %s168 = sphi 0, %s166
      %s169 = sphi 0, %s168
      %s183 = sphi 0, %s169
      %s187 = sphi 0, %s187
      %s189 = sphi 0, %s187
      %s190 = sphi 0, %s189
      %s204 = sphi 0, %s190
      %s208 = sphi 0, %s208
      %s210 = sphi 0, %s208
      %s211 = sphi 0, %s210
      %s225 = sphi 0, %s211
      %s233 = sphi 0, %s235
      %s236 = sphi 0, %s233
      %s237 = sphi 0, %s236
      %s253 = sphi 0, %s237
    $region4: #{tpu_custom_call.1} parent=1 // loop_header_branch
      %30 = sbr.rel (%p28) target = $region8
    $region5: #{tpu_custom_call.1} parent=1 // loop_body
      %s32 = ssub.s32 %s27, 1
      %s33 = ssub.s32 %s27, 2
      %s40 = sadd.s32 1, %s35
      %p41 = scmp.ge.s32.totalorder %s40, 1
      %s42 = scalar_select %p41, 0, %s40
      %s43 = sadd.s32 1, %s34
      %s44 = scalar_select %p41, %s43, %s34
      %p45 = scmp.ge.s32.totalorder %s44, 2
      %s46 = scalar_select %p45, 0, %s44
      %s47 = ssub.s32 %s34, %s46
      %s48 = ssub.s32 %s35, %s42
      %s49 = sor.u32 %s47, %s48
      %p50 = scmp.eq.s32.totalorder %s49, 0
      %s52 = sadd.s32 %s51, 1
      %s53 = scalar_select %p50, %s51, %s52
      %p56 = pneg %p50
      %p57 = scmp.eq.s32.totalorder %s27, 1
      %p58 = por %p56, %p57
      %p59 = scmp.ne.s32.totalorder %s51, %s54
      %p60 = scmp.eq.s32.totalorder %s27, 0
      %p61 = por %p59, %p60
      %p62 = scmp.ne.s32.totalorder %s51, %s54
      %p63 = scmp.eq.s32.totalorder %s32, 1
      %p64 = por %p62, %p63
      %p65 = scmp.ne.s32.totalorder %s54, %s55
      %p66 = scmp.eq.s32.totalorder %s32, 0
      %p67 = por %p65, %p66
      %p68 = scmp.ne.s32.totalorder %s54, %s55
      %p69 = scmp.eq.s32.totalorder %s33, 1
      %p70 = por %p68, %p69
      %p72 = scmp.ne.s32.totalorder %s55, %s71
      %p73 = scmp.eq.s32.totalorder %s33, 0
      %p74 = por %p72, %p73
      %s75 = ssub.s32 %s34, %s46
      %s76 = ssub.s32 %s35, %s42
      %s77 = sor.u32 %s75, %s76
      %p78 = scmp.eq.s32.totalorder %s77, 0
      %s80 = sadd.s32 %s79, 1
      %s81 = scalar_select %p78, %s79, %s80
      %p84 = pneg %p78
      %p85 = scmp.eq.s32.totalorder %s27, 1
      %p86 = por %p84, %p85
      %p87 = scmp.ne.s32.totalorder %s79, %s82
      %p88 = scmp.eq.s32.totalorder %s27, 0
      %p89 = por %p87, %p88
      %p90 = scmp.ne.s32.totalorder %s79, %s82
      %p91 = scmp.eq.s32.totalorder %s32, 1
      %p92 = por %p90, %p91
      %p93 = scmp.ne.s32.totalorder %s82, %s83
      %p94 = scmp.eq.s32.totalorder %s32, 0
      %p95 = por %p93, %p94
      %p96 = scmp.ne.s32.totalorder %s82, %s83
      %p97 = scmp.eq.s32.totalorder %s33, 1
      %p98 = por %p96, %p97
      %p100 = scmp.ne.s32.totalorder %s83, %s99
      %p101 = scmp.eq.s32.totalorder %s33, 0
      %p102 = por %p100, %p101
      %s104 = sadd.s32 %s103, 1
      %p107 = scmp.eq.s32.totalorder %s27, 1
      %p108 = scmp.ne.s32.totalorder %s103, %s105
      %p109 = scmp.eq.s32.totalorder %s27, 0
      %p110 = por %p108, %p109
      %p111 = scmp.ne.s32.totalorder %s103, %s105
      %p112 = scmp.eq.s32.totalorder %s32, 1
      %p113 = por %p111, %p112
      %p114 = scmp.ne.s32.totalorder %s105, %s106
      %p115 = scmp.eq.s32.totalorder %s32, 0
      %p116 = por %p114, %p115
      %p117 = scmp.ne.s32.totalorder %s105, %s106
      %p118 = scmp.eq.s32.totalorder %s33, 1
      %p119 = por %p117, %p118
      %p121 = scmp.ne.s32.totalorder %s106, %s120
      %p122 = scmp.eq.s32.totalorder %s33, 0
      %p123 = por %p121, %p122
      %s125 = sadd.s32 %s124, 1
      %p128 = scmp.eq.s32.totalorder %s27, 1
      %p129 = scmp.ne.s32.totalorder %s124, %s126
      %p130 = scmp.eq.s32.totalorder %s27, 0
      %p131 = por %p129, %p130
      %p132 = scmp.ne.s32.totalorder %s124, %s126
      %p133 = scmp.eq.s32.totalorder %s32, 1
      %p134 = por %p132, %p133
      %p135 = scmp.ne.s32.totalorder %s126, %s127
      %p136 = scmp.eq.s32.totalorder %s32, 0
      %p137 = por %p135, %p136
      %p138 = scmp.ne.s32.totalorder %s126, %s127
      %p139 = scmp.eq.s32.totalorder %s33, 1
      %p140 = por %p138, %p139
      %p142 = scmp.ne.s32.totalorder %s127, %s141
      %p143 = scmp.eq.s32.totalorder %s33, 0
      %p144 = por %p142, %p143
      %s146 = sadd.s32 %s145, 1
      %p149 = scmp.eq.s32.totalorder %s27, 1
      %p150 = scmp.ne.s32.totalorder %s145, %s147
      %p151 = scmp.eq.s32.totalorder %s27, 0
      %p152 = por %p150, %p151
      %p153 = scmp.ne.s32.totalorder %s145, %s147
      %p154 = scmp.eq.s32.totalorder %s32, 1
      %p155 = por %p153, %p154
      %p156 = scmp.ne.s32.totalorder %s147, %s148
      %p157 = scmp.eq.s32.totalorder %s32, 0
      %p158 = por %p156, %p157
      %p159 = scmp.ne.s32.totalorder %s147, %s148
      %p160 = scmp.eq.s32.totalorder %s33, 1
      %p161 = por %p159, %p160
      %p163 = scmp.ne.s32.totalorder %s148, %s162
      %p164 = scmp.eq.s32.totalorder %s33, 0
      %p165 = por %p163, %p164
      %s167 = sadd.s32 %s166, 1
      %p170 = scmp.eq.s32.totalorder %s27, 1
      %p171 = scmp.ne.s32.totalorder %s166, %s168
      %p172 = scmp.eq.s32.totalorder %s27, 0
      %p173 = por %p171, %p172
      %p174 = scmp.ne.s32.totalorder %s166, %s168
      %p175 = scmp.eq.s32.totalorder %s32, 1
      %p176 = por %p174, %p175
      %p177 = scmp.ne.s32.totalorder %s168, %s169
      %p178 = scmp.eq.s32.totalorder %s32, 0
      %p179 = por %p177, %p178
      %p180 = scmp.ne.s32.totalorder %s168, %s169
      %p181 = scmp.eq.s32.totalorder %s33, 1
      %p182 = por %p180, %p181
      %p184 = scmp.ne.s32.totalorder %s169, %s183
      %p185 = scmp.eq.s32.totalorder %s33, 0
      %p186 = por %p184, %p185
      %s188 = sadd.s32 %s187, 1
      %p191 = scmp.eq.s32.totalorder %s27, 1
      %p192 = scmp.ne.s32.totalorder %s187, %s189
      %p193 = scmp.eq.s32.totalorder %s27, 0
      %p194 = por %p192, %p193
      %p195 = scmp.ne.s32.totalorder %s187, %s189
      %p196 = scmp.eq.s32.totalorder %s32, 1
      %p197 = por %p195, %p196
      %p198 = scmp.ne.s32.totalorder %s189, %s190
      %p199 = scmp.eq.s32.totalorder %s32, 0
      %p200 = por %p198, %p199
      %p201 = scmp.ne.s32.totalorder %s189, %s190
      %p202 = scmp.eq.s32.totalorder %s33, 1
      %p203 = por %p201, %p202
      %p205 = scmp.ne.s32.totalorder %s190, %s204
      %p206 = scmp.eq.s32.totalorder %s33, 0
      %p207 = por %p205, %p206
      %s209 = sadd.s32 %s208, 1
      %p212 = scmp.eq.s32.totalorder %s27, 1
      %p213 = scmp.ne.s32.totalorder %s208, %s210
      %p214 = scmp.eq.s32.totalorder %s27, 0
      %p215 = por %p213, %p214
      %p216 = scmp.ne.s32.totalorder %s208, %s210
      %p217 = scmp.eq.s32.totalorder %s32, 1
      %p218 = por %p216, %p217
      %p219 = scmp.ne.s32.totalorder %s210, %s211
      %p220 = scmp.eq.s32.totalorder %s32, 0
      %p221 = por %p219, %p220
      %p222 = scmp.ne.s32.totalorder %s210, %s211
      %p223 = scmp.eq.s32.totalorder %s33, 1
      %p224 = por %p222, %p223
      %p226 = scmp.ne.s32.totalorder %s211, %s225
      %p227 = scmp.eq.s32.totalorder %s33, 0
      %p228 = por %p226, %p227
      %s229 = ssub.s32 %s34, %s46
      %s230 = ssub.s32 %s35, %s42
      %s231 = sor.u32 %s229, %s230
      %p232 = scmp.eq.s32.totalorder %s231, 0
      %s234 = sadd.s32 %s233, 1
      %s235 = scalar_select %p232, %s233, %s234
      %p238 = pneg %p232
      %p239 = scmp.eq.s32.totalorder %s27, 1
      %p240 = por %p238, %p239
      %p241 = scmp.ne.s32.totalorder %s233, %s236
      %p242 = scmp.eq.s32.totalorder %s27, 0
      %p243 = por %p241, %p242
      %p244 = scmp.ne.s32.totalorder %s233, %s236
      %p245 = scmp.eq.s32.totalorder %s32, 1
      %p246 = por %p244, %p245
      %p247 = scmp.ne.s32.totalorder %s236, %s237
      %p248 = scmp.eq.s32.totalorder %s32, 0
      %p249 = por %p247, %p248
      %p250 = scmp.ne.s32.totalorder %s236, %s237
      %p251 = scmp.eq.s32.totalorder %s33, 1
      %p252 = por %p250, %p251
      %p254 = scmp.ne.s32.totalorder %s237, %s253
      %p255 = scmp.eq.s32.totalorder %s33, 0
      %p256 = por %p254, %p255
      %p257 = scmp.le.s32.totalorder 1, %s27
      %p258 = scmp.lt.s32.totalorder %s27, 3
      %p259 = pnand %p257, %p258
      %p260 = pneg %p259
      // Predicated region
      $region9: #{tpu_custom_call.1} parent=5 // pred_check
        _
      $region10: #{tpu_custom_call.1} parent=5 // pred_check_branch
        %262 = sbr.rel (%p259) target = $region12
      $region11: #{tpu_custom_call.1} parent=5 // pred_region
        %s263 = ssub.s32 %s27, 1
        // Predicated region
        $region13: #{tpu_custom_call.1} parent=11 // pred_check
          %p264 = pneg %p116
        $region14: #{tpu_custom_call.1} parent=11 // pred_check_branch
          %266 = sbr.rel (%p264) target = $region16
        $region15: #{tpu_custom_call.1} parent=11 // pred_region
          _
        $region16: #{tpu_custom_call.1} parent=11 // pred_fallthru
          _
        // Predicated region
        $region17: #{tpu_custom_call.1} parent=11 // pred_check
          %p267 = pneg %p137
        $region18: #{tpu_custom_call.1} parent=11 // pred_check_branch
          %269 = sbr.rel (%p267) target = $region20
        $region19: #{tpu_custom_call.1} parent=11 // pred_region
          _
        $region20: #{tpu_custom_call.1} parent=11 // pred_fallthru
          _
        // Predicated region
        $region21: #{tpu_custom_call.1} parent=11 // pred_check
          %p270 = pneg %p158
        $region22: #{tpu_custom_call.1} parent=11 // pred_check_branch
          %272 = sbr.rel (%p270) target = $region24
        $region23: #{tpu_custom_call.1} parent=11 // pred_region
          _
        $region24: #{tpu_custom_call.1} parent=11 // pred_fallthru
          _
        // Predicated region
        $region25: #{tpu_custom_call.1} parent=11 // pred_check
          %p273 = pneg %p179
        $region26: #{tpu_custom_call.1} parent=11 // pred_check_branch
          %275 = sbr.rel (%p273) target = $region28
        $region27: #{tpu_custom_call.1} parent=11 // pred_region
          _
        $region28: #{tpu_custom_call.1} parent=11 // pred_fallthru
          _
        // Predicated region
        $region29: #{tpu_custom_call.1} parent=11 // pred_check
          %p276 = pneg %p200
        $region30: #{tpu_custom_call.1} parent=11 // pred_check_branch
          %278 = sbr.rel (%p276) target = $region32
        $region31: #{tpu_custom_call.1} parent=11 // pred_region
          _
        $region32: #{tpu_custom_call.1} parent=11 // pred_fallthru
          _
        // Predicated region
        $region33: #{tpu_custom_call.1} parent=11 // pred_check
          %p279 = pneg %p221
        $region34: #{tpu_custom_call.1} parent=11 // pred_check_branch
          %281 = sbr.rel (%p279) target = $region36
        $region35: #{tpu_custom_call.1} parent=11 // pred_region
          _
        $region36: #{tpu_custom_call.1} parent=11 // pred_fallthru
          _
      $region12: #{tpu_custom_call.1} parent=5 // pred_fallthru
        _
      %p282 = scmp.lt.s32.totalorder %s27, 2
      // Predicated region
      $region37: #{tpu_custom_call.1} parent=5 // pred_check
        %p283 = pneg %p282
      $region38: #{tpu_custom_call.1} parent=5 // pred_check_branch
        %285 = sbr.rel (%p283) target = $region40
      $region39: #{tpu_custom_call.1} parent=5 // pred_region
        // Predicated region
        $region41: #{tpu_custom_call.1} parent=39 // pred_check
          %p286 = pneg %p61
        $region42: #{tpu_custom_call.1} parent=39 // pred_check_branch
          %288 = sbr.rel (%p286) target = $region44
        $region43: #{tpu_custom_call.1} parent=39 // pred_region
          %p289 = scmp.lt.s32.totalorder %s34, 1
          %s290 = scalar_select %p289, %s34, 1
          %p291 = scmp.lt.s32.totalorder %s35, 0
          %s292 = scalar_select %p291, %s35, 0
          %s293 = sadd.s32 %s292, %s290
          %s294 = smul.addr %s293, 4
          %s295 = scalar_lea.vmem %s1, %s294
        $region44: #{tpu_custom_call.1} parent=39 // pred_fallthru
          _
        // Predicated region
        $region45: #{tpu_custom_call.1} parent=39 // pred_check
          %p296 = pneg %p89
        $region46: #{tpu_custom_call.1} parent=39 // pred_check_branch
          %298 = sbr.rel (%p296) target = $region48
        $region47: #{tpu_custom_call.1} parent=39 // pred_region
          %s299 = sand.u32 %s79, 1
          %s300 = scalar_lea.sflag [#allocation7], %s299
          %s301 = sand.u32 %s79, 1
          %s302 = smul.addr %s301, 64
          %s303 = scalar_lea.vmem [#allocation6], %s302
          %s304 = smul.u32 2, %s35
          %s306 = ssub.s32 1024, 1024
          %307 = vsyncadd %s300, %s306
          %s308 = smul.addr %s34, 8
          %s309 = sadd.s32 %s304, %s308
          %s310 = smul.addr %s309, 128
          %s311 = scalar_lea.hbm %s2, %s310
          %s312 = sshll.u32 %s303, 4
          %s313 = int_to_ptr.vmem [resolvable:$true] %s312
          %318 = dma.hbm_to_vmem [thread:$0]  %s311, 1024, %s313, %s300, 128, 128, 8
        $region48: #{tpu_custom_call.1} parent=39 // pred_fallthru
          _
      $region40: #{tpu_custom_call.1} parent=5 // pred_fallthru
        _
      %p319 = scmp.le.s32.totalorder 1, %s27
      %p320 = scmp.lt.s32.totalorder %s27, 3
      %p321 = pnand %p319, %p320
      %p322 = pneg %p321
      // Predicated region
      $region49: #{tpu_custom_call.1} parent=5 // pred_check
        _
      $region50: #{tpu_custom_call.1} parent=5 // pred_check_branch
        %324 = sbr.rel (%p321) target = $region52
      $region51: #{tpu_custom_call.1} parent=5 // pred_region
        %s325 = ssub.s32 %s27, 1
        %s326 = sand.u32 %s82, 1
        %s327 = scalar_lea.sflag [#allocation7], %s326
        %s328 = sand.u32 %s82, 1
        %s329 = smul.addr %s328, 64
        %s330 = scalar_lea.vmem [#allocation6], %s329
        // Predicated region
        $region53: #{tpu_custom_call.1} parent=51 // pred_check
          %p331 = pneg %p95
        $region54: #{tpu_custom_call.1} parent=51 // pred_check_branch
          %333 = sbr.rel (%p331) target = $region56
        $region55: #{tpu_custom_call.1} parent=51 // pred_region
          %334 = dma.done %s327, 1024
        $region56: #{tpu_custom_call.1} parent=51 // pred_fallthru
          _
        %p335 = scmp.lt.s32.totalorder %s36, 1
        %s336 = scalar_select %p335, %s36, 1
        %p337 = scmp.lt.s32.totalorder %s37, 0
        %s338 = scalar_select %p337, %s37, 0
        %s339 = sadd.s32 %s338, %s336
        %s340 = smul.addr %s339, 4
        %s341 = scalar_lea.vmem %s1, %s340
        %p342 = pneg %p67
        %p343 = pneg %p64
        %s344 = sand.u32 %s82, 1
        %s345 = scalar_lea.sflag [#allocation7], %s344
        %s346 = sand.u32 %s82, 1
        %s347 = smul.addr %s346, 64
        %s348 = scalar_lea.vmem [#allocation6], %s347
        %p349 = pneg %p95
        %p350 = pneg %p92
        %p351 = pneg %p116
        %p352 = pneg %p113
        %p353 = pneg %p137
        %p354 = pneg %p134
        %p355 = pneg %p158
        %p356 = pneg %p155
        %p357 = pneg %p179
        %p358 = pneg %p176
        %p359 = pneg %p200
        %p360 = pneg %p197
        %p361 = pneg %p221
        %p362 = pneg %p218
        %p363 = pneg %p249
        %p364 = pneg %p246
        %s365 = sand.u32 %s236, 1
        %s366 = scalar_lea.sflag [#allocation8], %s365
        %s367 = sand.u32 %s236, 1
        %s368 = smul.addr %s367, 64
        %s369 = scalar_lea.vmem [#allocation9], %s368
        %p370 = scmp.lt.s32.totalorder %s36, 1
        %s371 = scalar_select %p370, %s36, 1
        %p372 = scmp.lt.s32.totalorder %s37, 0
        %s373 = scalar_select %p372, %s37, 0
        %s374 = sadd.s32 %s373, %s371
        %s375 = smul.addr %s374, 4
        %s376 = scalar_lea.vmem %s1, %s375
        %s377 = smul.u32 2, %s37
        %s378 = smul.u32 2, %s37
        %s379 = sld [smem:[#allocation5]]
        %s380 = sld [smem:[#allocation5 + $0x1]]
        %s381 = sld [smem:[#allocation5 + $0x2]]
        %s382 = sld [smem:[#allocation5 + $0x3]]
        %s383 = sld [smem:[#allocation5 + $0x4]]
        %s384 = sld [smem:[#allocation5 + $0x5]]
        %v385 = vld [vmem:[%s7] sm:$0xff]
        %v386 = vld [vmem:[%s7 + $0x8] sm:$0xff]
        %v387 = vld [vmem:[%s330] sm:$0x1]
        %v388 = vld [vmem:[%s330 + $0x10] sm:$0x1]
        %v389 = vld [vmem:[%s330 + $0x20] sm:$0x1]
        %v390 = vld [vmem:[%s330 + $0x30] sm:$0x1]
        %v395 = vrot.slane %v388, 7
        %vm396 = vcmask 1041409
        %v397 = vsel %vm396, %v395, %v387
        %v398 = vrot.slane %v389, 6
        %vm399 = vcmask 1042434
        %v400 = vsel %vm399, %v398, %v397
        %v401 = vrot.slane %v390, 5
        %vm402 = vcmask 1043459
        %v403 = vsel %vm402, %v401, %v400
        %vm404 = vcmask 130048
        %v405 = vsel %vm404, %v403, 0
        %407 = vmatprep.subr.mxu0 0.0
        %408 = vmatpush1.msra.mxu0 0.0
        %409 = vmatprep.subr.mxu0 0.0
        %410 = vmatpush1.msra.mxu0 0.0
        %411 = vmatprep.subr.mxu0 0.0
        %412 = vmatpush1.msra.mxu0 0.0
        %413 = vmatprep.subr.mxu0 0.0
        %414 = vmatpush1.msra.mxu0 0.0
        %415 = vmatprep.subr.mxu0 0.0
        %416 = vmatpush1.msra.mxu0 0.0
        %417 = vmatprep.subr.mxu0 0.0
        %418 = vmatpush1.msra.mxu0 0.0
        %419 = vmatprep.subr.mxu0 0.0
        %420 = vmatpush1.msra.mxu0 0.0
        %421 = vmatprep.subr.mxu0 0.0
        %422 = vmatpush1.msra.mxu0 0.0
        %423 = vmatprep.subr.mxu0 0.0
        %424 = vmatpush1.msra.mxu0 0.0
        %425 = vmatprep.subr.mxu0 0.0
        %426 = vmatpush1.msra.mxu0 0.0
        %427 = vmatprep.subr.mxu0 0.0
        %428 = vmatpush1.msra.mxu0 0.0
        %429 = vmatprep.subr.mxu0 0.0
        %430 = vmatpush1.msra.mxu0 0.0
        %431 = vmatprep.subr.mxu0 0.0
        %432 = vmatpush1.msra.mxu0 0.0
        %433 = vmatprep.subr.mxu0 0.0
        %434 = vmatpush1.msra.mxu0 0.0
        %435 = vmatprep.subr.mxu0 0.0
        %436 = vmatpush1.msra.mxu0 %v386
        %437 = vmatprep.subr.mxu0 0.0
        %438 = vmatpush1.msra.mxu0 %v385
        %439 = vmatprep.subr.mxu0 0.0
        %440 = vmatpush2.msra.mxu0 0.0
        %441 = vmatprep.subr.mxu0 0.0
        %442 = vmatpush2.msra.mxu0 0.0
        %443 = vmatprep.subr.mxu0 0.0
        %444 = vmatpush2.msra.mxu0 0.0
        %445 = vmatprep.subr.mxu0 0.0
        %446 = vmatpush2.msra.mxu0 0.0
        %447 = vmatprep.subr.mxu0 0.0
        %448 = vmatpush2.msra.mxu0 0.0
        %449 = vmatprep.subr.mxu0 0.0
        %450 = vmatpush2.msra.mxu0 0.0
        %451 = vmatprep.subr.mxu0 0.0
        %452 = vmatpush2.msra.mxu0 0.0
        %453 = vmatprep.subr.mxu0 0.0
        %454 = vmatpush2.msra.mxu0 0.0
        %455 = vmatprep.subr.mxu0 0.0
        %456 = vmatpush2.msra.mxu0 0.0
        %457 = vmatprep.subr.mxu0 0.0
        %458 = vmatpush2.msra.mxu0 0.0
        %459 = vmatprep.subr.mxu0 0.0
        %460 = vmatpush2.msra.mxu0 0.0
        %461 = vmatprep.subr.mxu0 0.0
        %462 = vmatpush2.msra.mxu0 0.0
        %463 = vmatprep.subr.mxu0 0.0
        %464 = vmatpush2.msra.mxu0 0.0
        %465 = vmatprep.subr.mxu0 0.0
        %466 = vmatpush2.msra.mxu0 0.0
        %467 = vmatprep.subr.mxu0 0.0
        %468 = vmatpush2.msra.mxu0 0.0
        %469 = vmatprep.subr.mxu0 0.0
        %470 = vmatpush2.msra.mxu0 0.0
        %471 = vmatprep.mubr.f32.mxu0 0.0
        %472 = vmatmul.mubr.f32.gmra.mxu0 %v405
        %v473 = vpop.f32.mrf.mxu0
        %v474 = vadd.f32 0.0, %v473
        %v475 = vpop.f32.mrf.mxu0
        %476 = vdwg.mxu0
        %vm477 = vcmask 60416
        %478 = vst.msk [vmem:[#allocation2] sm:$0xf] %vm477, %v474
        %v479 = vld [vmem:[%s330 + $0x2] sm:$0x1]
        %v480 = vld [vmem:[%s330 + $0x12] sm:$0x1]
        %v481 = vld [vmem:[%s330 + $0x22] sm:$0x1]
        %v482 = vld [vmem:[%s330 + $0x32] sm:$0x1]
        %v487 = vrot.slane %v480, 7
        %v488 = vsel %vm396, %v487, %v479
        %v489 = vrot.slane %v481, 6
        %v490 = vsel %vm399, %v489, %v488
        %v491 = vrot.slane %v482, 5
        %v492 = vsel %vm402, %v491, %v490
        %v493 = vsel %vm404, %v492, 0
        %495 = vmatprep.subr.mxu0 0.0
        %496 = vmatpush1.msra.mxu0 0.0
        %497 = vmatprep.subr.mxu0 0.0
        %498 = vmatpush1.msra.mxu0 0.0
        %499 = vmatprep.subr.mxu0 0.0
        %500 = vmatpush1.msra.mxu0 0.0
        %501 = vmatprep.subr.mxu0 0.0
        %502 = vmatpush1.msra.mxu0 0.0
        %503 = vmatprep.subr.mxu0 0.0
        %504 = vmatpush1.msra.mxu0 0.0
        %505 = vmatprep.subr.mxu0 0.0
        %506 = vmatpush1.msra.mxu0 0.0
        %507 = vmatprep.subr.mxu0 0.0
        %508 = vmatpush1.msra.mxu0 0.0
        %509 = vmatprep.subr.mxu0 0.0
        %510 = vmatpush1.msra.mxu0 0.0
        %511 = vmatprep.subr.mxu0 0.0
        %512 = vmatpush1.msra.mxu0 0.0
        %513 = vmatprep.subr.mxu0 0.0
        %514 = vmatpush1.msra.mxu0 0.0
        %515 = vmatprep.subr.mxu0 0.0
        %516 = vmatpush1.msra.mxu0 0.0
        %517 = vmatprep.subr.mxu0 0.0
        %518 = vmatpush1.msra.mxu0 0.0
        %519 = vmatprep.subr.mxu0 0.0
        %520 = vmatpush1.msra.mxu0 0.0
        %521 = vmatprep.subr.mxu0 0.0
        %522 = vmatpush1.msra.mxu0 0.0
        %523 = vmatprep.subr.mxu0 0.0
        %524 = vmatpush1.msra.mxu0 %v386
        %525 = vmatprep.subr.mxu0 0.0
        %526 = vmatpush1.msra.mxu0 %v385
        %527 = vmatprep.subr.mxu0 0.0
        %528 = vmatpush2.msra.mxu0 0.0
        %529 = vmatprep.subr.mxu0 0.0
        %530 = vmatpush2.msra.mxu0 0.0
        %531 = vmatprep.subr.mxu0 0.0
        %532 = vmatpush2.msra.mxu0 0.0
        %533 = vmatprep.subr.mxu0 0.0
        %534 = vmatpush2.msra.mxu0 0.0
        %535 = vmatprep.subr.mxu0 0.0
        %536 = vmatpush2.msra.mxu0 0.0
        %537 = vmatprep.subr.mxu0 0.0
        %538 = vmatpush2.msra.mxu0 0.0
        %539 = vmatprep.subr.mxu0 0.0
        %540 = vmatpush2.msra.mxu0 0.0
        %541 = vmatprep.subr.mxu0 0.0
        %542 = vmatpush2.msra.mxu0 0.0
        %543 = vmatprep.subr.mxu0 0.0
        %544 = vmatpush2.msra.mxu0 0.0
        %545 = vmatprep.subr.mxu0 0.0
        %546 = vmatpush2.msra.mxu0 0.0
        %547 = vmatprep.subr.mxu0 0.0
        %548 = vmatpush2.msra.mxu0 0.0
        %549 = vmatprep.subr.mxu0 0.0
        %550 = vmatpush2.msra.mxu0 0.0
        %551 = vmatprep.subr.mxu0 0.0
        %552 = vmatpush2.msra.mxu0 0.0
        %553 = vmatprep.subr.mxu0 0.0
        %554 = vmatpush2.msra.mxu0 0.0
        %555 = vmatprep.subr.mxu0 0.0
        %556 = vmatpush2.msra.mxu0 0.0
        %557 = vmatprep.subr.mxu0 0.0
        %558 = vmatpush2.msra.mxu0 0.0
        %559 = vmatprep.mubr.f32.mxu0 0.0
        %560 = vmatmul.mubr.f32.gmra.mxu0 %v493
        %v561 = vpop.f32.mrf.mxu0
        %v562 = vadd.f32 0.0, %v561
        %v563 = vpop.f32.mrf.mxu0
        %564 = vdwg.mxu0
        %566 = vrot.lane.b32.xlu0 %v562, 8
        %v567 = vpop.permute.xlu0 %566
        %vm569 = vcmask 126016
        %570 = vst.msk [vmem:[#allocation2] sm:$0xf] %vm569, %v567
        %v571 = vld [vmem:[%s330 + $0x4] sm:$0x1]
        %v572 = vld [vmem:[%s330 + $0x14] sm:$0x1]
        %v573 = vld [vmem:[%s330 + $0x24] sm:$0x1]
        %v574 = vld [vmem:[%s330 + $0x34] sm:$0x1]
        %v579 = vrot.slane %v572, 7
        %v580 = vsel %vm396, %v579, %v571
        %v581 = vrot.slane %v573, 6
        %v582 = vsel %vm399, %v581, %v580
        %v583 = vrot.slane %v574, 5
        %v584 = vsel %vm402, %v583, %v582
        %v585 = vsel %vm404, %v584, 0
        %587 = vmatprep.subr.mxu0 0.0
        %588 = vmatpush1.msra.mxu0 0.0
        %589 = vmatprep.subr.mxu0 0.0
        %590 = vmatpush1.msra.mxu0 0.0
        %591 = vmatprep.subr.mxu0 0.0
        %592 = vmatpush1.msra.mxu0 0.0
        %593 = vmatprep.subr.mxu0 0.0
        %594 = vmatpush1.msra.mxu0 0.0
        %595 = vmatprep.subr.mxu0 0.0
        %596 = vmatpush1.msra.mxu0 0.0
        %597 = vmatprep.subr.mxu0 0.0
        %598 = vmatpush1.msra.mxu0 0.0
        %599 = vmatprep.subr.mxu0 0.0
        %600 = vmatpush1.msra.mxu0 0.0
        %601 = vmatprep.subr.mxu0 0.0
        %602 = vmatpush1.msra.mxu0 0.0
        %603 = vmatprep.subr.mxu0 0.0
        %604 = vmatpush1.msra.mxu0 0.0
        %605 = vmatprep.subr.mxu0 0.0
        %606 = vmatpush1.msra.mxu0 0.0
        %607 = vmatprep.subr.mxu0 0.0
        %608 = vmatpush1.msra.mxu0 0.0
        %609 = vmatprep.subr.mxu0 0.0
        %610 = vmatpush1.msra.mxu0 0.0
        %611 = vmatprep.subr.mxu0 0.0
        %612 = vmatpush1.msra.mxu0 0.0
        %613 = vmatprep.subr.mxu0 0.0
        %614 = vmatpush1.msra.mxu0 0.0
        %615 = vmatprep.subr.mxu0 0.0
        %616 = vmatpush1.msra.mxu0 %v386
        %617 = vmatprep.subr.mxu0 0.0
        %618 = vmatpush1.msra.mxu0 %v385
        %619 = vmatprep.subr.mxu0 0.0
        %620 = vmatpush2.msra.mxu0 0.0
        %621 = vmatprep.subr.mxu0 0.0
        %622 = vmatpush2.msra.mxu0 0.0
        %623 = vmatprep.subr.mxu0 0.0
        %624 = vmatpush2.msra.mxu0 0.0
        %625 = vmatprep.subr.mxu0 0.0
        %626 = vmatpush2.msra.mxu0 0.0
        %627 = vmatprep.subr.mxu0 0.0
        %628 = vmatpush2.msra.mxu0 0.0
        %629 = vmatprep.subr.mxu0 0.0
        %630 = vmatpush2.msra.mxu0 0.0
        %631 = vmatprep.subr.mxu0 0.0
        %632 = vmatpush2.msra.mxu0 0.0
        %633 = vmatprep.subr.mxu0 0.0
        %634 = vmatpush2.msra.mxu0 0.0
        %635 = vmatprep.subr.mxu0 0.0
        %636 = vmatpush2.msra.mxu0 0.0
        %637 = vmatprep.subr.mxu0 0.0
        %638 = vmatpush2.msra.mxu0 0.0
        %639 = vmatprep.subr.mxu0 0.0
        %640 = vmatpush2.msra.mxu0 0.0
        %641 = vmatprep.subr.mxu0 0.0
        %642 = vmatpush2.msra.mxu0 0.0
        %643 = vmatprep.subr.mxu0 0.0
        %644 = vmatpush2.msra.mxu0 0.0
        %645 = vmatprep.subr.mxu0 0.0
        %646 = vmatpush2.msra.mxu0 0.0
        %647 = vmatprep.subr.mxu0 0.0
        %648 = vmatpush2.msra.mxu0 0.0
        %649 = vmatprep.subr.mxu0 0.0
        %650 = vmatpush2.msra.mxu0 0.0
        %651 = vmatprep.mubr.f32.mxu0 0.0
        %652 = vmatmul.mubr.f32.gmra.mxu0 %v585
        %v653 = vpop.f32.mrf.mxu0
        %v654 = vadd.f32 0.0, %v653
        %v655 = vpop.f32.mrf.mxu0
        %656 = vdwg.mxu0
        %658 = vrot.lane.b32.xlu0 %v654, 16
        %v659 = vpop.permute.xlu0 %658
        %vm661 = vcmask 191616
        %662 = vst.msk [vmem:[#allocation2] sm:$0xf] %vm661, %v659
        %v663 = vld [vmem:[%s330 + $0x6] sm:$0x1]
        %v664 = vld [vmem:[%s330 + $0x16] sm:$0x1]
        %v665 = vld [vmem:[%s330 + $0x26] sm:$0x1]
        %v666 = vld [vmem:[%s330 + $0x36] sm:$0x1]
        %v671 = vrot.slane %v664, 7
        %v672 = vsel %vm396, %v671, %v663
        %v673 = vrot.slane %v665, 6
        %v674 = vsel %vm399, %v673, %v672
        %v675 = vrot.slane %v666, 5
        %v676 = vsel %vm402, %v675, %v674
        %v677 = vsel %vm404, %v676, 0
        %679 = vmatprep.subr.mxu0 0.0
        %680 = vmatpush1.msra.mxu0 0.0
        %681 = vmatprep.subr.mxu0 0.0
        %682 = vmatpush1.msra.mxu0 0.0
        %683 = vmatprep.subr.mxu0 0.0
        %684 = vmatpush1.msra.mxu0 0.0
        %685 = vmatprep.subr.mxu0 0.0
        %686 = vmatpush1.msra.mxu0 0.0
        %687 = vmatprep.subr.mxu0 0.0
        %688 = vmatpush1.msra.mxu0 0.0
        %689 = vmatprep.subr.mxu0 0.0
        %690 = vmatpush1.msra.mxu0 0.0
        %691 = vmatprep.subr.mxu0 0.0
        %692 = vmatpush1.msra.mxu0 0.0
        %693 = vmatprep.subr.mxu0 0.0
        %694 = vmatpush1.msra.mxu0 0.0
        %695 = vmatprep.subr.mxu0 0.0
        %696 = vmatpush1.msra.mxu0 0.0
        %697 = vmatprep.subr.mxu0 0.0
        %698 = vmatpush1.msra.mxu0 0.0
        %699 = vmatprep.subr.mxu0 0.0
        %700 = vmatpush1.msra.mxu0 0.0
        %701 = vmatprep.subr.mxu0 0.0
        %702 = vmatpush1.msra.mxu0 0.0
        %703 = vmatprep.subr.mxu0 0.0
        %704 = vmatpush1.msra.mxu0 0.0
        %705 = vmatprep.subr.mxu0 0.0
        %706 = vmatpush1.msra.mxu0 0.0
        %707 = vmatprep.subr.mxu0 0.0
        %708 = vmatpush1.msra.mxu0 %v386
        %709 = vmatprep.subr.mxu0 0.0
        %710 = vmatpush1.msra.mxu0 %v385
        %711 = vmatprep.subr.mxu0 0.0
        %712 = vmatpush2.msra.mxu0 0.0
        %713 = vmatprep.subr.mxu0 0.0
        %714 = vmatpush2.msra.mxu0 0.0
        %715 = vmatprep.subr.mxu0 0.0
        %716 = vmatpush2.msra.mxu0 0.0
        %717 = vmatprep.subr.mxu0 0.0
        %718 = vmatpush2.msra.mxu0 0.0
        %719 = vmatprep.subr.mxu0 0.0
        %720 = vmatpush2.msra.mxu0 0.0
        %721 = vmatprep.subr.mxu0 0.0
        %722 = vmatpush2.msra.mxu0 0.0
        %723 = vmatprep.subr.mxu0 0.0
        %724 = vmatpush2.msra.mxu0 0.0
        %725 = vmatprep.subr.mxu0 0.0
        %726 = vmatpush2.msra.mxu0 0.0
        %727 = vmatprep.subr.mxu0 0.0
        %728 = vmatpush2.msra.mxu0 0.0
        %729 = vmatprep.subr.mxu0 0.0
        %730 = vmatpush2.msra.mxu0 0.0
        %731 = vmatprep.subr.mxu0 0.0
        %732 = vmatpush2.msra.mxu0 0.0
        %733 = vmatprep.subr.mxu0 0.0
        %734 = vmatpush2.msra.mxu0 0.0
        %735 = vmatprep.subr.mxu0 0.0
        %736 = vmatpush2.msra.mxu0 0.0
        %737 = vmatprep.subr.mxu0 0.0
        %738 = vmatpush2.msra.mxu0 0.0
        %739 = vmatprep.subr.mxu0 0.0
        %740 = vmatpush2.msra.mxu0 0.0
        %741 = vmatprep.subr.mxu0 0.0
        %742 = vmatpush2.msra.mxu0 0.0
        %743 = vmatprep.mubr.f32.mxu0 0.0
        %744 = vmatmul.mubr.f32.gmra.mxu0 %v677
        %v745 = vpop.f32.mrf.mxu0
        %v746 = vadd.f32 0.0, %v745
        %v747 = vpop.f32.mrf.mxu0
        %748 = vdwg.mxu0
        %750 = vrot.lane.b32.xlu0 %v746, 24
        %v751 = vpop.permute.xlu0 %750
        %vm753 = vcmask 257216
        %754 = vst.msk [vmem:[#allocation2] sm:$0xf] %vm753, %v751
        %v755 = vld [vmem:[%s330 + $0x8] sm:$0x1]
        %v756 = vld [vmem:[%s330 + $0x18] sm:$0x1]
        %v757 = vld [vmem:[%s330 + $0x28] sm:$0x1]
        %v758 = vld [vmem:[%s330 + $0x38] sm:$0x1]
        %v763 = vrot.slane %v756, 7
        %v764 = vsel %vm396, %v763, %v755
        %v765 = vrot.slane %v757, 6
        %v766 = vsel %vm399, %v765, %v764
        %v767 = vrot.slane %v758, 5
        %v768 = vsel %vm402, %v767, %v766
        %v769 = vsel %vm404, %v768, 0
        %771 = vmatprep.subr.mxu0 0.0
        %772 = vmatpush1.msra.mxu0 0.0
        %773 = vmatprep.subr.mxu0 0.0
        %774 = vmatpush1.msra.mxu0 0.0
        %775 = vmatprep.subr.mxu0 0.0
        %776 = vmatpush1.msra.mxu0 0.0
        %777 = vmatprep.subr.mxu0 0.0
        %778 = vmatpush1.msra.mxu0 0.0
        %779 = vmatprep.subr.mxu0 0.0
        %780 = vmatpush1.msra.mxu0 0.0
        %781 = vmatprep.subr.mxu0 0.0
        %782 = vmatpush1.msra.mxu0 0.0
        %783 = vmatprep.subr.mxu0 0.0
        %784 = vmatpush1.msra.mxu0 0.0
        %785 = vmatprep.subr.mxu0 0.0
        %786 = vmatpush1.msra.mxu0 0.0
        %787 = vmatprep.subr.mxu0 0.0
        %788 = vmatpush1.msra.mxu0 0.0
        %789 = vmatprep.subr.mxu0 0.0
        %790 = vmatpush1.msra.mxu0 0.0
        %791 = vmatprep.subr.mxu0 0.0
        %792 = vmatpush1.msra.mxu0 0.0
        %793 = vmatprep.subr.mxu0 0.0
        %794 = vmatpush1.msra.mxu0 0.0
        %795 = vmatprep.subr.mxu0 0.0
        %796 = vmatpush1.msra.mxu0 0.0
        %797 = vmatprep.subr.mxu0 0.0
        %798 = vmatpush1.msra.mxu0 0.0
        %799 = vmatprep.subr.mxu0 0.0
        %800 = vmatpush1.msra.mxu0 %v386
        %801 = vmatprep.subr.mxu0 0.0
        %802 = vmatpush1.msra.mxu0 %v385
        %803 = vmatprep.subr.mxu0 0.0
        %804 = vmatpush2.msra.mxu0 0.0
        %805 = vmatprep.subr.mxu0 0.0
        %806 = vmatpush2.msra.mxu0 0.0
        %807 = vmatprep.subr.mxu0 0.0
        %808 = vmatpush2.msra.mxu0 0.0
        %809 = vmatprep.subr.mxu0 0.0
        %810 = vmatpush2.msra.mxu0 0.0
        %811 = vmatprep.subr.mxu0 0.0
        %812 = vmatpush2.msra.mxu0 0.0
        %813 = vmatprep.subr.mxu0 0.0
        %814 = vmatpush2.msra.mxu0 0.0
        %815 = vmatprep.subr.mxu0 0.0
        %816 = vmatpush2.msra.mxu0 0.0
        %817 = vmatprep.subr.mxu0 0.0
        %818 = vmatpush2.msra.mxu0 0.0
        %819 = vmatprep.subr.mxu0 0.0
        %820 = vmatpush2.msra.mxu0 0.0
        %821 = vmatprep.subr.mxu0 0.0
        %822 = vmatpush2.msra.mxu0 0.0
        %823 = vmatprep.subr.mxu0 0.0
        %824 = vmatpush2.msra.mxu0 0.0
        %825 = vmatprep.subr.mxu0 0.0
        %826 = vmatpush2.msra.mxu0 0.0
        %827 = vmatprep.subr.mxu0 0.0
        %828 = vmatpush2.msra.mxu0 0.0
        %829 = vmatprep.subr.mxu0 0.0
        %830 = vmatpush2.msra.mxu0 0.0
        %831 = vmatprep.subr.mxu0 0.0
        %832 = vmatpush2.msra.mxu0 0.0
        %833 = vmatprep.subr.mxu0 0.0
        %834 = vmatpush2.msra.mxu0 0.0
        %835 = vmatprep.mubr.f32.mxu0 0.0
        %836 = vmatmul.mubr.f32.gmra.mxu0 %v769
        %v837 = vpop.f32.mrf.mxu0
        %v838 = vadd.f32 0.0, %v837
        %v839 = vpop.f32.mrf.mxu0
        %840 = vdwg.mxu0
        %842 = vrot.lane.b32.xlu0 %v838, 32
        %v843 = vpop.permute.xlu0 %842
        %vm845 = vcmask 322816
        %846 = vst.msk [vmem:[#allocation2] sm:$0xf] %vm845, %v843
        %v847 = vld [vmem:[%s330 + $0xa] sm:$0x1]
        %v848 = vld [vmem:[%s330 + $0x1a] sm:$0x1]
        %v849 = vld [vmem:[%s330 + $0x2a] sm:$0x1]
        %v850 = vld [vmem:[%s330 + $0x3a] sm:$0x1]
        %v855 = vrot.slane %v848, 7
        %v856 = vsel %vm396, %v855, %v847
        %v857 = vrot.slane %v849, 6
        %v858 = vsel %vm399, %v857, %v856
        %v859 = vrot.slane %v850, 5
        %v860 = vsel %vm402, %v859, %v858
        %v861 = vsel %vm404, %v860, 0
        %863 = vmatprep.subr.mxu0 0.0
        %864 = vmatpush1.msra.mxu0 0.0
        %865 = vmatprep.subr.mxu0 0.0
        %866 = vmatpush1.msra.mxu0 0.0
        %867 = vmatprep.subr.mxu0 0.0
        %868 = vmatpush1.msra.mxu0 0.0
        %869 = vmatprep.subr.mxu0 0.0
        %870 = vmatpush1.msra.mxu0 0.0
        %871 = vmatprep.subr.mxu0 0.0
        %872 = vmatpush1.msra.mxu0 0.0
        %873 = vmatprep.subr.mxu0 0.0
        %874 = vmatpush1.msra.mxu0 0.0
        %875 = vmatprep.subr.mxu0 0.0
        %876 = vmatpush1.msra.mxu0 0.0
        %877 = vmatprep.subr.mxu0 0.0
        %878 = vmatpush1.msra.mxu0 0.0
        %879 = vmatprep.subr.mxu0 0.0
        %880 = vmatpush1.msra.mxu0 0.0
        %881 = vmatprep.subr.mxu0 0.0
        %882 = vmatpush1.msra.mxu0 0.0
        %883 = vmatprep.subr.mxu0 0.0
        %884 = vmatpush1.msra.mxu0 0.0
        %885 = vmatprep.subr.mxu0 0.0
        %886 = vmatpush1.msra.mxu0 0.0
        %887 = vmatprep.subr.mxu0 0.0
        %888 = vmatpush1.msra.mxu0 0.0
        %889 = vmatprep.subr.mxu0 0.0
        %890 = vmatpush1.msra.mxu0 0.0
        %891 = vmatprep.subr.mxu0 0.0
        %892 = vmatpush1.msra.mxu0 %v386
        %893 = vmatprep.subr.mxu0 0.0
        %894 = vmatpush1.msra.mxu0 %v385
        %895 = vmatprep.subr.mxu0 0.0
        %896 = vmatpush2.msra.mxu0 0.0
        %897 = vmatprep.subr.mxu0 0.0
        %898 = vmatpush2.msra.mxu0 0.0
        %899 = vmatprep.subr.mxu0 0.0
        %900 = vmatpush2.msra.mxu0 0.0
        %901 = vmatprep.subr.mxu0 0.0
        %902 = vmatpush2.msra.mxu0 0.0
        %903 = vmatprep.subr.mxu0 0.0
        %904 = vmatpush2.msra.mxu0 0.0
        %905 = vmatprep.subr.mxu0 0.0
        %906 = vmatpush2.msra.mxu0 0.0
        %907 = vmatprep.subr.mxu0 0.0
        %908 = vmatpush2.msra.mxu0 0.0
        %909 = vmatprep.subr.mxu0 0.0
        %910 = vmatpush2.msra.mxu0 0.0
        %911 = vmatprep.subr.mxu0 0.0
        %912 = vmatpush2.msra.mxu0 0.0
        %913 = vmatprep.subr.mxu0 0.0
        %914 = vmatpush2.msra.mxu0 0.0
        %915 = vmatprep.subr.mxu0 0.0
        %916 = vmatpush2.msra.mxu0 0.0
        %917 = vmatprep.subr.mxu0 0.0
        %918 = vmatpush2.msra.mxu0 0.0
        %919 = vmatprep.subr.mxu0 0.0
        %920 = vmatpush2.msra.mxu0 0.0
        %921 = vmatprep.subr.mxu0 0.0
        %922 = vmatpush2.msra.mxu0 0.0
        %923 = vmatprep.subr.mxu0 0.0
        %924 = vmatpush2.msra.mxu0 0.0
        %925 = vmatprep.subr.mxu0 0.0
        %926 = vmatpush2.msra.mxu0 0.0
        %927 = vmatprep.mubr.f32.mxu0 0.0
        %928 = vmatmul.mubr.f32.gmra.mxu0 %v861
        %v929 = vpop.f32.mrf.mxu0
        %v930 = vadd.f32 0.0, %v929
        %v931 = vpop.f32.mrf.mxu0
        %932 = vdwg.mxu0
        %934 = vrot.lane.b32.xlu0 %v930, 40
        %v935 = vpop.permute.xlu0 %934
        %vm937 = vcmask 388416
        %938 = vst.msk [vmem:[#allocation2] sm:$0xf] %vm937, %v935
        %v939 = vld [vmem:[%s330 + $0xc] sm:$0x1]
        %v940 = vld [vmem:[%s330 + $0x1c] sm:$0x1]
        %v941 = vld [vmem:[%s330 + $0x2c] sm:$0x1]
        %v942 = vld [vmem:[%s330 + $0x3c] sm:$0x1]
        %v947 = vrot.slane %v940, 7
        %v948 = vsel %vm396, %v947, %v939
        %v949 = vrot.slane %v941, 6
        %v950 = vsel %vm399, %v949, %v948
        %v951 = vrot.slane %v942, 5
        %v952 = vsel %vm402, %v951, %v950
        %v953 = vsel %vm404, %v952, 0
        %955 = vmatprep.subr.mxu0 0.0
        %956 = vmatpush1.msra.mxu0 0.0
        %957 = vmatprep.subr.mxu0 0.0
        %958 = vmatpush1.msra.mxu0 0.0
        %959 = vmatprep.subr.mxu0 0.0
        %960 = vmatpush1.msra.mxu0 0.0
        %961 = vmatprep.subr.mxu0 0.0
        %962 = vmatpush1.msra.mxu0 0.0
        %963 = vmatprep.subr.mxu0 0.0
        %964 = vmatpush1.msra.mxu0 0.0
        %965 = vmatprep.subr.mxu0 0.0
        %966 = vmatpush1.msra.mxu0 0.0
        %967 = vmatprep.subr.mxu0 0.0
        %968 = vmatpush1.msra.mxu0 0.0
        %969 = vmatprep.subr.mxu0 0.0
        %970 = vmatpush1.msra.mxu0 0.0
        %971 = vmatprep.subr.mxu0 0.0
        %972 = vmatpush1.msra.mxu0 0.0
        %973 = vmatprep.subr.mxu0 0.0
        %974 = vmatpush1.msra.mxu0 0.0
        %975 = vmatprep.subr.mxu0 0.0
        %976 = vmatpush1.msra.mxu0 0.0
        %977 = vmatprep.subr.mxu0 0.0
        %978 = vmatpush1.msra.mxu0 0.0
        %979 = vmatprep.subr.mxu0 0.0
        %980 = vmatpush1.msra.mxu0 0.0
        %981 = vmatprep.subr.mxu0 0.0
        %982 = vmatpush1.msra.mxu0 0.0
        %983 = vmatprep.subr.mxu0 0.0
        %984 = vmatpush1.msra.mxu0 %v386
        %985 = vmatprep.subr.mxu0 0.0
        %986 = vmatpush1.msra.mxu0 %v385
        %987 = vmatprep.subr.mxu0 0.0
        %988 = vmatpush2.msra.mxu0 0.0
        %989 = vmatprep.subr.mxu0 0.0
        %990 = vmatpush2.msra.mxu0 0.0
        %991 = vmatprep.subr.mxu0 0.0
        %992 = vmatpush2.msra.mxu0 0.0
        %993 = vmatprep.subr.mxu0 0.0
        %994 = vmatpush2.msra.mxu0 0.0
        %995 = vmatprep.subr.mxu0 0.0
        %996 = vmatpush2.msra.mxu0 0.0
        %997 = vmatprep.subr.mxu0 0.0
        %998 = vmatpush2.msra.mxu0 0.0
        %999 = vmatprep.subr.mxu0 0.0
        %1000 = vmatpush2.msra.mxu0 0.0
        %1001 = vmatprep.subr.mxu0 0.0
        %1002 = vmatpush2.msra.mxu0 0.0
        %1003 = vmatprep.subr.mxu0 0.0
        %1004 = vmatpush2.msra.mxu0 0.0
        %1005 = vmatprep.subr.mxu0 0.0
        %1006 = vmatpush2.msra.mxu0 0.0
        %1007 = vmatprep.subr.mxu0 0.0
        %1008 = vmatpush2.msra.mxu0 0.0
        %1009 = vmatprep.subr.mxu0 0.0
        %1010 = vmatpush2.msra.mxu0 0.0
        %1011 = vmatprep.subr.mxu0 0.0
        %1012 = vmatpush2.msra.mxu0 0.0
        %1013 = vmatprep.subr.mxu0 0.0
        %1014 = vmatpush2.msra.mxu0 0.0
        %1015 = vmatprep.subr.mxu0 0.0
        %1016 = vmatpush2.msra.mxu0 0.0
        %1017 = vmatprep.subr.mxu0 0.0
        %1018 = vmatpush2.msra.mxu0 0.0
        %1019 = vmatprep.mubr.f32.mxu0 0.0
        %1020 = vmatmul.mubr.f32.gmra.mxu0 %v953
        %v1021 = vpop.f32.mrf.mxu0
        %v1022 = vadd.f32 0.0, %v1021
        %v1023 = vpop.f32.mrf.mxu0
        %1024 = vdwg.mxu0
        %1026 = vrot.lane.b32.xlu0 %v1022, 48
        %v1027 = vpop.permute.xlu0 %1026
        %vm1029 = vcmask 454016
        %1030 = vst.msk [vmem:[#allocation2] sm:$0xf] %vm1029, %v1027
        %v1031 = vld [vmem:[%s330 + $0xe] sm:$0x1]
        %v1032 = vld [vmem:[%s330 + $0x1e] sm:$0x1]
        %v1033 = vld [vmem:[%s330 + $0x2e] sm:$0x1]
        %v1034 = vld [vmem:[%s330 + $0x3e] sm:$0x1]
        %v1039 = vrot.slane %v1032, 7
        %v1040 = vsel %vm396, %v1039, %v1031
        %v1041 = vrot.slane %v1033, 6
        %v1042 = vsel %vm399, %v1041, %v1040
        %v1043 = vrot.slane %v1034, 5
        %v1044 = vsel %vm402, %v1043, %v1042
        %v1045 = vsel %vm404, %v1044, 0
        %1047 = vmatprep.subr.mxu0 0.0
        %1048 = vmatpush1.msra.mxu0 0.0
        %1049 = vmatprep.subr.mxu0 0.0
        %1050 = vmatpush1.msra.mxu0 0.0
        %1051 = vmatprep.subr.mxu0 0.0
        %1052 = vmatpush1.msra.mxu0 0.0
        %1053 = vmatprep.subr.mxu0 0.0
        %1054 = vmatpush1.msra.mxu0 0.0
        %1055 = vmatprep.subr.mxu0 0.0
        %1056 = vmatpush1.msra.mxu0 0.0
        %1057 = vmatprep.subr.mxu0 0.0
        %1058 = vmatpush1.msra.mxu0 0.0
        %1059 = vmatprep.subr.mxu0 0.0
        %1060 = vmatpush1.msra.mxu0 0.0
        %1061 = vmatprep.subr.mxu0 0.0
        %1062 = vmatpush1.msra.mxu0 0.0
        %1063 = vmatprep.subr.mxu0 0.0
        %1064 = vmatpush1.msra.mxu0 0.0
        %1065 = vmatprep.subr.mxu0 0.0
        %1066 = vmatpush1.msra.mxu0 0.0
        %1067 = vmatprep.subr.mxu0 0.0
        %1068 = vmatpush1.msra.mxu0 0.0
        %1069 = vmatprep.subr.mxu0 0.0
        %1070 = vmatpush1.msra.mxu0 0.0
        %1071 = vmatprep.subr.mxu0 0.0
        %1072 = vmatpush1.msra.mxu0 0.0
        %1073 = vmatprep.subr.mxu0 0.0
        %1074 = vmatpush1.msra.mxu0 0.0
        %1075 = vmatprep.subr.mxu0 0.0
        %1076 = vmatpush1.msra.mxu0 %v386
        %1077 = vmatprep.subr.mxu0 0.0
        %1078 = vmatpush1.msra.mxu0 %v385
        %1079 = vmatprep.subr.mxu0 0.0
        %1080 = vmatpush2.msra.mxu0 0.0
        %1081 = vmatprep.subr.mxu0 0.0
        %1082 = vmatpush2.msra.mxu0 0.0
        %1083 = vmatprep.subr.mxu0 0.0
        %1084 = vmatpush2.msra.mxu0 0.0
        %1085 = vmatprep.subr.mxu0 0.0
        %1086 = vmatpush2.msra.mxu0 0.0
        %1087 = vmatprep.subr.mxu0 0.0
        %1088 = vmatpush2.msra.mxu0 0.0
        %1089 = vmatprep.subr.mxu0 0.0
        %1090 = vmatpush2.msra.mxu0 0.0
        %1091 = vmatprep.subr.mxu0 0.0
        %1092 = vmatpush2.msra.mxu0 0.0
        %1093 = vmatprep.subr.mxu0 0.0
        %1094 = vmatpush2.msra.mxu0 0.0
        %1095 = vmatprep.subr.mxu0 0.0
        %1096 = vmatpush2.msra.mxu0 0.0
        %1097 = vmatprep.subr.mxu0 0.0
        %1098 = vmatpush2.msra.mxu0 0.0
        %1099 = vmatprep.subr.mxu0 0.0
        %1100 = vmatpush2.msra.mxu0 0.0
        %1101 = vmatprep.subr.mxu0 0.0
        %1102 = vmatpush2.msra.mxu0 0.0
        %1103 = vmatprep.subr.mxu0 0.0
        %1104 = vmatpush2.msra.mxu0 0.0
        %1105 = vmatprep.subr.mxu0 0.0
        %1106 = vmatpush2.msra.mxu0 0.0
        %1107 = vmatprep.subr.mxu0 0.0
        %1108 = vmatpush2.msra.mxu0 0.0
        %1109 = vmatprep.subr.mxu0 0.0
        %1110 = vmatpush2.msra.mxu0 0.0
        %1111 = vmatprep.mubr.f32.mxu0 0.0
        %1112 = vmatmul.mubr.f32.gmra.mxu0 %v1045
        %v1113 = vpop.f32.mrf.mxu0
        %v1114 = vadd.f32 0.0, %v1113
        %v1115 = vpop.f32.mrf.mxu0
        %1116 = vdwg.mxu0
        %1118 = vrot.lane.b32.xlu0 %v1114, 56
        %v1119 = vpop.permute.xlu0 %1118
        %vm1121 = vcmask 519616
        %1122 = vst.msk [vmem:[#allocation2] sm:$0xf] %vm1121, %v1119
        %v1123 = vld [vmem:[%s3] sm:$0xff]
        %v1124 = vld [vmem:[%s376] sm:$0xf]
        %v1125 = vld [vmem:[%s4] sm:$0xff]
        %v1126 = vld [vmem:[#allocation2] sm:$0xf]
        %vm1127 = vcmask 31744
        %v1129 = vsel %vm1127, %v1125, 0
        %vm1131 = vcmask 1043456
        %v1133 = vsel %vm1131, %v1126, 0
        %1135 = vmatprep.subr.mxu0 0.0
        %1136 = vmatpush1.msra.mxu0 0.0
        %1137 = vmatprep.subr.mxu0 0.0
        %1138 = vmatpush1.msra.mxu0 0.0
        %1139 = vmatprep.subr.mxu0 0.0
        %1140 = vmatpush1.msra.mxu0 0.0
        %1141 = vmatprep.subr.mxu0 0.0
        %1142 = vmatpush1.msra.mxu0 0.0
        %1143 = vmatprep.subr.mxu0 0.0
        %1144 = vmatpush1.msra.mxu0 0.0
        %1145 = vmatprep.subr.mxu0 0.0
        %1146 = vmatpush1.msra.mxu0 0.0
        %1147 = vmatprep.subr.mxu0 0.0
        %1148 = vmatpush1.msra.mxu0 0.0
        %1149 = vmatprep.subr.mxu0 0.0
        %1150 = vmatpush1.msra.mxu0 0.0
        %1151 = vmatprep.subr.mxu0 0.0
        %1152 = vmatpush1.msra.mxu0 0.0
        %1153 = vmatprep.subr.mxu0 0.0
        %1154 = vmatpush1.msra.mxu0 0.0
        %1155 = vmatprep.subr.mxu0 0.0
        %1156 = vmatpush1.msra.mxu0 0.0
        %1157 = vmatprep.subr.mxu0 0.0
        %1158 = vmatpush1.msra.mxu0 0.0
        %1159 = vmatprep.subr.mxu0 0.0
        %1160 = vmatpush1.msra.mxu0 0.0
        %1161 = vmatprep.subr.mxu0 0.0
        %1162 = vmatpush1.msra.mxu0 0.0
        %1163 = vmatprep.subr.mxu0 0.0
        %1164 = vmatpush1.msra.mxu0 0.0
        %1165 = vmatprep.subr.mxu0 0.0
        %1166 = vmatpush1.msra.mxu0 %v1133
        %1167 = vmatprep.subr.mxu0 0.0
        %1168 = vmatpush2.msra.mxu0 0.0
        %1169 = vmatprep.subr.mxu0 0.0
        %1170 = vmatpush2.msra.mxu0 0.0
        %1171 = vmatprep.subr.mxu0 0.0
        %1172 = vmatpush2.msra.mxu0 0.0
        %1173 = vmatprep.subr.mxu0 0.0
        %1174 = vmatpush2.msra.mxu0 0.0
        %1175 = vmatprep.subr.mxu0 0.0
        %1176 = vmatpush2.msra.mxu0 0.0
        %1177 = vmatprep.subr.mxu0 0.0
        %1178 = vmatpush2.msra.mxu0 0.0
        %1179 = vmatprep.subr.mxu0 0.0
        %1180 = vmatpush2.msra.mxu0 0.0
        %1181 = vmatprep.subr.mxu0 0.0
        %1182 = vmatpush2.msra.mxu0 0.0
        %1183 = vmatprep.subr.mxu0 0.0
        %1184 = vmatpush2.msra.mxu0 0.0
        %1185 = vmatprep.subr.mxu0 0.0
        %1186 = vmatpush2.msra.mxu0 0.0
        %1187 = vmatprep.subr.mxu0 0.0
        %1188 = vmatpush2.msra.mxu0 0.0
        %1189 = vmatprep.subr.mxu0 0.0
        %1190 = vmatpush2.msra.mxu0 0.0
        %1191 = vmatprep.subr.mxu0 0.0
        %1192 = vmatpush2.msra.mxu0 0.0
        %1193 = vmatprep.subr.mxu0 0.0
        %1194 = vmatpush2.msra.mxu0 0.0
        %1195 = vmatprep.subr.mxu0 0.0
        %1196 = vmatpush2.msra.mxu0 0.0
        %1197 = vmatprep.subr.mxu0 0.0
        %1198 = vmatpush2.msra.mxu0 0.0
        %1199 = vmatprep.mubr.f32.mxu0 0.0
        %1200 = vmatmul.mubr.f32.gmra.mxu0 %v1129
        %v1201 = vpop.f32.mrf.mxu0
        %v1202 = vadd.f32 0.0, %v1201
        %v1203 = vpop.f32.mrf.mxu0
        %1204 = vdwg.mxu0
        %v1206 = vsel %vm1127, %v1123, 0
        %v1209 = vsel %vm1131, %v1124, 0
        %1211 = vmatprep.subr.mxu0 0.0
        %1212 = vmatpush1.msra.mxu0 0.0
        %1213 = vmatprep.subr.mxu0 0.0
        %1214 = vmatpush1.msra.mxu0 0.0
        %1215 = vmatprep.subr.mxu0 0.0
        %1216 = vmatpush1.msra.mxu0 0.0
        %1217 = vmatprep.subr.mxu0 0.0
        %1218 = vmatpush1.msra.mxu0 0.0
        %1219 = vmatprep.subr.mxu0 0.0
        %1220 = vmatpush1.msra.mxu0 0.0
        %1221 = vmatprep.subr.mxu0 0.0
        %1222 = vmatpush1.msra.mxu0 0.0
        %1223 = vmatprep.subr.mxu0 0.0
        %1224 = vmatpush1.msra.mxu0 0.0
        %1225 = vmatprep.subr.mxu0 0.0
        %1226 = vmatpush1.msra.mxu0 0.0
        %1227 = vmatprep.subr.mxu0 0.0
        %1228 = vmatpush1.msra.mxu0 0.0
        %1229 = vmatprep.subr.mxu0 0.0
        %1230 = vmatpush1.msra.mxu0 0.0
        %1231 = vmatprep.subr.mxu0 0.0
        %1232 = vmatpush1.msra.mxu0 0.0
        %1233 = vmatprep.subr.mxu0 0.0
        %1234 = vmatpush1.msra.mxu0 0.0
        %1235 = vmatprep.subr.mxu0 0.0
        %1236 = vmatpush1.msra.mxu0 0.0
        %1237 = vmatprep.subr.mxu0 0.0
        %1238 = vmatpush1.msra.mxu0 0.0
        %1239 = vmatprep.subr.mxu0 0.0
        %1240 = vmatpush1.msra.mxu0 0.0
        %1241 = vmatprep.subr.mxu0 0.0
        %1242 = vmatpush1.msra.mxu0 %v1209
        %1243 = vmatprep.subr.mxu0 0.0
        %1244 = vmatpush2.msra.mxu0 0.0
        %1245 = vmatprep.subr.mxu0 0.0
        %1246 = vmatpush2.msra.mxu0 0.0
        %1247 = vmatprep.subr.mxu0 0.0
        %1248 = vmatpush2.msra.mxu0 0.0
        %1249 = vmatprep.subr.mxu0 0.0
        %1250 = vmatpush2.msra.mxu0 0.0
        %1251 = vmatprep.subr.mxu0 0.0
        %1252 = vmatpush2.msra.mxu0 0.0
        %1253 = vmatprep.subr.mxu0 0.0
        %1254 = vmatpush2.msra.mxu0 0.0
        %1255 = vmatprep.subr.mxu0 0.0
        %1256 = vmatpush2.msra.mxu0 0.0
        %1257 = vmatprep.subr.mxu0 0.0
        %1258 = vmatpush2.msra.mxu0 0.0
        %1259 = vmatprep.subr.mxu0 0.0
        %1260 = vmatpush2.msra.mxu0 0.0
        %1261 = vmatprep.subr.mxu0 0.0
        %1262 = vmatpush2.msra.mxu0 0.0
        %1263 = vmatprep.subr.mxu0 0.0
        %1264 = vmatpush2.msra.mxu0 0.0
        %1265 = vmatprep.subr.mxu0 0.0
        %1266 = vmatpush2.msra.mxu0 0.0
        %1267 = vmatprep.subr.mxu0 0.0
        %1268 = vmatpush2.msra.mxu0 0.0
        %1269 = vmatprep.subr.mxu0 0.0
        %1270 = vmatpush2.msra.mxu0 0.0
        %1271 = vmatprep.subr.mxu0 0.0
        %1272 = vmatpush2.msra.mxu0 0.0
        %1273 = vmatprep.subr.mxu0 0.0
        %1274 = vmatpush2.msra.mxu0 0.0
        %1275 = vmatprep.mubr.f32.mxu0 0.0
        %1276 = vmatmul.mubr.f32.gmra.mxu0 %v1206
        %v1277 = vpop.f32.mrf.mxu0
        %v1278 = vadd.f32 %v1202, %v1277
        %v1279 = vpop.f32.mrf.mxu0
        %1280 = vdwg.mxu0
        %v1281 = vld [vmem:[%s5] sm:$0xff]
        %1283 = vset.pattern.permute.xlu0 0
        %1284 = vperm.xlu0 %1283, %v1281
        %v1285 = vpop.permute.xlu0 %1284
        %v1287 = vadd.f32 %v1278, %v1285
        %v1288 = vmax.f32 %v1287, 0.0
        %v1289 = vld [vmem:[%s6] sm:$0x1]
        %v1290 = vstv %s379
        %vm1291 = vcmask 64512
        %v1293 = vsel %vm1291, %v1289, 0
        %1295 = vmatprep.subr.mxu0 0.0
        %1296 = vmatpush1.msra.mxu0 0.0
        %1297 = vmatprep.subr.mxu0 0.0
        %1298 = vmatpush1.msra.mxu0 0.0
        %1299 = vmatprep.subr.mxu0 0.0
        %1300 = vmatpush1.msra.mxu0 0.0
        %1301 = vmatprep.subr.mxu0 0.0
        %1302 = vmatpush1.msra.mxu0 0.0
        %1303 = vmatprep.subr.mxu0 0.0
        %1304 = vmatpush1.msra.mxu0 0.0
        %1305 = vmatprep.subr.mxu0 0.0
        %1306 = vmatpush1.msra.mxu0 0.0
        %1307 = vmatprep.subr.mxu0 0.0
        %1308 = vmatpush1.msra.mxu0 0.0
        %1309 = vmatprep.subr.mxu0 0.0
        %1310 = vmatpush1.msra.mxu0 0.0
        %1311 = vmatprep.subr.mxu0 0.0
        %1312 = vmatpush1.msra.mxu0 0.0
        %1313 = vmatprep.subr.mxu0 0.0
        %1314 = vmatpush1.msra.mxu0 0.0
        %1315 = vmatprep.subr.mxu0 0.0
        %1316 = vmatpush1.msra.mxu0 0.0
        %1317 = vmatprep.subr.mxu0 0.0
        %1318 = vmatpush1.msra.mxu0 0.0
        %1319 = vmatprep.subr.mxu0 0.0
        %1320 = vmatpush1.msra.mxu0 0.0
        %1321 = vmatprep.subr.mxu0 0.0
        %1322 = vmatpush1.msra.mxu0 0.0
        %1323 = vmatprep.subr.mxu0 0.0
        %1324 = vmatpush1.msra.mxu0 0.0
        %1325 = vmatprep.subr.mxu0 0.0
        %1326 = vmatpush1.msra.mxu0 %v1288
        %1327 = vmatprep.subr.mxu0 0.0
        %1328 = vmatpush2.msra.mxu0 0.0
        %1329 = vmatprep.subr.mxu0 0.0
        %1330 = vmatpush2.msra.mxu0 0.0
        %1331 = vmatprep.subr.mxu0 0.0
        %1332 = vmatpush2.msra.mxu0 0.0
        %1333 = vmatprep.subr.mxu0 0.0
        %1334 = vmatpush2.msra.mxu0 0.0
        %1335 = vmatprep.subr.mxu0 0.0
        %1336 = vmatpush2.msra.mxu0 0.0
        %1337 = vmatprep.subr.mxu0 0.0
        %1338 = vmatpush2.msra.mxu0 0.0
        %1339 = vmatprep.subr.mxu0 0.0
        %1340 = vmatpush2.msra.mxu0 0.0
        %1341 = vmatprep.subr.mxu0 0.0
        %1342 = vmatpush2.msra.mxu0 0.0
        %1343 = vmatprep.subr.mxu0 0.0
        %1344 = vmatpush2.msra.mxu0 0.0
        %1345 = vmatprep.subr.mxu0 0.0
        %1346 = vmatpush2.msra.mxu0 0.0
        %1347 = vmatprep.subr.mxu0 0.0
        %1348 = vmatpush2.msra.mxu0 0.0
        %1349 = vmatprep.subr.mxu0 0.0
        %1350 = vmatpush2.msra.mxu0 0.0
        %1351 = vmatprep.subr.mxu0 0.0
        %1352 = vmatpush2.msra.mxu0 0.0
        %1353 = vmatprep.subr.mxu0 0.0
        %1354 = vmatpush2.msra.mxu0 0.0
        %1355 = vmatprep.subr.mxu0 0.0
        %1356 = vmatpush2.msra.mxu0 0.0
        %1357 = vmatprep.subr.mxu0 0.0
        %1358 = vmatpush2.msra.mxu0 0.0
        %1359 = vmatprep.mubr.f32.mxu0 0.0
        %1360 = vmatmul.mubr.f32.gmra.mxu0 %v1293
        %v1361 = vpop.f32.mrf.mxu0
        %v1362 = vadd.f32 %v1290, %v1361
        %v1363 = vpop.f32.mrf.mxu0
        %1364 = vdwg.mxu0
        %v1365 = vxor.u32 %v1362, 2147483648
        %v1366 = vmul.f32 %v1365, 1.442695
        %v1367 = vpow.pop %v1366
        %v1368 = vadd.f32 %v1367, 1.0
        %v1369 = vrcp.pop %v1368
        %v1370 = vmul.f32 1.0, %v1369
        %vm1371 = vcmask 57344
        %1372 = vst.msk [vmem:[#allocation3] sm:$0x1] %vm1371, %v1370
        %1373 = vst.msk [vmem:[#allocation3 + $0x1] sm:$0x1] %vm1371, %v1370
        %1375 = vrot.lane.b32.xlu0 %v1370, 120
        %v1376 = vpop.permute.xlu0 %1375
        %1378 = vst.msk [vmem:[#allocation3 + $0x2] sm:$0x1] %vm1371, %v1376
        %1379 = vst.msk [vmem:[#allocation3 + $0x3] sm:$0x1] %vm1371, %v1376
        %1380 = vrot.lane.b32.xlu0 %v1370, 112
        %v1381 = vpop.permute.xlu0 %1380
        %1383 = vst.msk [vmem:[#allocation3 + $0x4] sm:$0x1] %vm1371, %v1381
        %1384 = vst.msk [vmem:[#allocation3 + $0x5] sm:$0x1] %vm1371, %v1381
        %1385 = vrot.lane.b32.xlu0 %v1370, 104
        %v1386 = vpop.permute.xlu0 %1385
        %1388 = vst.msk [vmem:[#allocation3 + $0x6] sm:$0x1] %vm1371, %v1386
        %1389 = vst.msk [vmem:[#allocation3 + $0x7] sm:$0x1] %vm1371, %v1386
        %1390 = vrot.lane.b32.xlu0 %v1370, 96
        %v1391 = vpop.permute.xlu0 %1390
        %1393 = vst.msk [vmem:[#allocation3 + $0x8] sm:$0x1] %vm1371, %v1391
        %1394 = vst.msk [vmem:[#allocation3 + $0x9] sm:$0x1] %vm1371, %v1391
        %1395 = vrot.lane.b32.xlu0 %v1370, 88
        %v1396 = vpop.permute.xlu0 %1395
        %1398 = vst.msk [vmem:[#allocation3 + $0xa] sm:$0x1] %vm1371, %v1396
        %1399 = vst.msk [vmem:[#allocation3 + $0xb] sm:$0x1] %vm1371, %v1396
        %1400 = vrot.lane.b32.xlu0 %v1370, 80
        %v1401 = vpop.permute.xlu0 %1400
        %1403 = vst.msk [vmem:[#allocation3 + $0xc] sm:$0x1] %vm1371, %v1401
        %1404 = vst.msk [vmem:[#allocation3 + $0xd] sm:$0x1] %vm1371, %v1401
        %1405 = vrot.lane.b32.xlu0 %v1370, 72
        %v1406 = vpop.permute.xlu0 %1405
        %1408 = vst.msk [vmem:[#allocation3 + $0xe] sm:$0x1] %vm1371, %v1406
        %1409 = vst.msk [vmem:[#allocation3 + $0xf] sm:$0x1] %vm1371, %v1406
        %v1410 = vld [vmem:[#allocation3] sm:$0xff]
        %v1411 = vld [vmem:[#allocation3 + $0x8] sm:$0xff]
        %v1412 = vld [vmem:[%s8] sm:$0xff]
        %v1414 = vsel %vm1291, %v1410, 0
        %v1417 = vsel %vm1291, %v1411, 0
        %1419 = vmatprep.subr.mxu0 0.0
        %1420 = vmatpush1.msra.mxu0 0.0
        %1421 = vmatprep.subr.mxu0 0.0
        %1422 = vmatpush1.msra.mxu0 0.0
        %1423 = vmatprep.subr.mxu0 0.0
        %1424 = vmatpush1.msra.mxu0 0.0
        %1425 = vmatprep.subr.mxu0 0.0
        %1426 = vmatpush1.msra.mxu0 0.0
        %1427 = vmatprep.subr.mxu0 0.0
        %1428 = vmatpush1.msra.mxu0 0.0
        %1429 = vmatprep.subr.mxu0 0.0
        %1430 = vmatpush1.msra.mxu0 0.0
        %1431 = vmatprep.subr.mxu0 0.0
        %1432 = vmatpush1.msra.mxu0 0.0
        %1433 = vmatprep.subr.mxu0 0.0
        %1434 = vmatpush1.msra.mxu0 0.0
        %1435 = vmatprep.subr.mxu0 0.0
        %1436 = vmatpush1.msra.mxu0 0.0
        %1437 = vmatprep.subr.mxu0 0.0
        %1438 = vmatpush1.msra.mxu0 0.0
        %1439 = vmatprep.subr.mxu0 0.0
        %1440 = vmatpush1.msra.mxu0 0.0
        %1441 = vmatprep.subr.mxu0 0.0
        %1442 = vmatpush1.msra.mxu0 0.0
        %1443 = vmatprep.subr.mxu0 0.0
        %1444 = vmatpush1.msra.mxu0 0.0
        %1445 = vmatprep.subr.mxu0 0.0
        %1446 = vmatpush1.msra.mxu0 0.0
        %1447 = vmatprep.subr.mxu0 0.0
        %1448 = vmatpush1.msra.mxu0 0.0
        %1449 = vmatprep.subr.mxu0 0.0
        %1450 = vmatpush1.msra.mxu0 %v1412
        %1451 = vmatprep.subr.mxu0 0.0
        %1452 = vmatpush2.msra.mxu0 0.0
        %1453 = vmatprep.subr.mxu0 0.0
        %1454 = vmatpush2.msra.mxu0 0.0
        %1455 = vmatprep.subr.mxu0 0.0
        %1456 = vmatpush2.msra.mxu0 0.0
        %1457 = vmatprep.subr.mxu0 0.0
        %1458 = vmatpush2.msra.mxu0 0.0
        %1459 = vmatprep.subr.mxu0 0.0
        %1460 = vmatpush2.msra.mxu0 0.0
        %1461 = vmatprep.subr.mxu0 0.0
        %1462 = vmatpush2.msra.mxu0 0.0
        %1463 = vmatprep.subr.mxu0 0.0
        %1464 = vmatpush2.msra.mxu0 0.0
        %1465 = vmatprep.subr.mxu0 0.0
        %1466 = vmatpush2.msra.mxu0 0.0
        %1467 = vmatprep.subr.mxu0 0.0
        %1468 = vmatpush2.msra.mxu0 0.0
        %1469 = vmatprep.subr.mxu0 0.0
        %1470 = vmatpush2.msra.mxu0 0.0
        %1471 = vmatprep.subr.mxu0 0.0
        %1472 = vmatpush2.msra.mxu0 0.0
        %1473 = vmatprep.subr.mxu0 0.0
        %1474 = vmatpush2.msra.mxu0 0.0
        %1475 = vmatprep.subr.mxu0 0.0
        %1476 = vmatpush2.msra.mxu0 0.0
        %1477 = vmatprep.subr.mxu0 0.0
        %1478 = vmatpush2.msra.mxu0 0.0
        %1479 = vmatprep.subr.mxu0 0.0
        %1480 = vmatpush2.msra.mxu0 0.0
        %1481 = vmatprep.subr.mxu0 0.0
        %1482 = vmatpush2.msra.mxu0 0.0
        %1483 = vmatprep.mubr.f32.mxu0 0.0
        %1484 = vmatmul.mubr.f32.gmra.mxu0 %v1414
        %v1485 = vpop.f32.mrf.mxu0
        %v1486 = vadd.f32 0.0, %v1485
        %v1487 = vpop.f32.mrf.mxu0
        %1488 = vmatprep.mubr.f32.mxu0 0.0
        %1489 = vmatmul.mubr.f32.gmra.mxu0 %v1417
        %v1490 = vpop.f32.mrf.mxu0
        %v1491 = vadd.f32 0.0, %v1490
        %v1492 = vpop.f32.mrf.mxu0
        %1493 = vdwg.mxu0
        %v1494 = vlaneseq
        %v1495 = vshrl.u32 %v1494, 7
        %v1496 = vadd.s32 %v1495, 8
        %vm1497 = vcmp.lt.s32.totalorder %v1495, 0
        %v1498 = vsub.s32 0, %v1495
        %v1499 = vsel %vm1497, %v1498, %v1495
        %v1500 = vshrl.u32 %v1499, 1
        %v1501 = vand.u32 %v1499, 1
        %v1502 = vsub.s32 0, %v1501
        %v1503 = vsel %vm1497, %v1502, %v1501
        %vm1504 = vcmp.lt.s32.totalorder %v1496, 0
        %v1505 = vsub.s32 0, %v1496
        %v1506 = vsel %vm1504, %v1505, %v1496
        %v1507 = vshrl.u32 %v1506, 1
        %v1508 = vand.u32 %v1506, 1
        %v1509 = vsub.s32 0, %v1508
        %v1510 = vsel %vm1504, %v1509, %v1508
        %vm1511 = vcmp.ne.s32.totalorder %v1503, 0
        %vm1512 = vcmp.ne.s32.totalorder %v1510, 0
        %vm1513 = vcmp.lt.s32.totalorder %v1503, 0
        %vm1514 = vcmp.lt.s32.totalorder %v1510, 0
        %vm1515 = vmand %vm1513, %vm1511
        %vm1516 = vmand %vm1514, %vm1512
        %v1517 = vadd.s32 %v1503, 2
        %v1518 = vadd.s32 %v1510, 2
        %v1519 = vsel %vm1515, %v1517, %v1503
        %v1520 = vsel %vm1516, %v1518, %v1510
        %v1521 = vlaneseq
        %v1522 = vand.u32 %v1521, 127
        %vm1523 = vcmp.lt.s32.totalorder %v1522, 0
        %v1524 = vsub.s32 0, %v1522
        %v1525 = vsel %vm1523, %v1524, %v1522
        %v1526 = vshrl.u32 %v1525, 1
        %v1527 = vand.u32 %v1525, 1
        %v1528 = vsub.s32 0, %v1527
        %v1529 = vsel %vm1523, %v1528, %v1527
        %vm1530 = vcmp.ne.s32.totalorder %v1529, 0
        %vm1531 = vcmp.lt.s32.totalorder %v1529, 0
        %vm1532 = vmand %vm1531, %vm1530
        %v1533 = vadd.s32 %v1529, 2
        %v1534 = vsel %vm1532, %v1533, %v1529
        %vm1535 = vcmp.eq.s32.totalorder %v1519, 0
        %vm1536 = vcmp.eq.s32.totalorder %v1520, 0
        %vm1537 = vcmp.eq.s32.totalorder %v1534, 0
        %v1538 = vstv %s381
        %v1539 = vstv %s382
        %v1540 = vsel %vm1537, %v1538, %v1539
        %v1541 = vstv %s383
        %v1542 = vstv %s384
        %v1543 = vsel %vm1537, %v1541, %v1542
        %v1544 = vsel %vm1535, %v1540, %v1543
        %v1545 = vsel %vm1536, %v1540, %v1543
        %v1546 = vmul.f32 %v1486, %v1544
        %v1547 = vmul.f32 %v1491, %v1545
        %v1548 = vstv %s380
        %v1549 = vadd.f32 %v1546, %v1548
        %v1550 = vadd.f32 %v1547, %v1548
        %v1551 = vld [vmem:[%s330] sm:$0xff]
        %v1552 = vld [vmem:[%s330 + $0x8] sm:$0xff]
        %v1553 = vld [vmem:[%s330 + $0x10] sm:$0xff]
        %v1554 = vld [vmem:[%s330 + $0x18] sm:$0xff]
        %v1555 = vld [vmem:[%s330 + $0x20] sm:$0xff]
        %v1556 = vld [vmem:[%s330 + $0x28] sm:$0xff]
        %v1557 = vld [vmem:[%s330 + $0x30] sm:$0xff]
        %v1558 = vld [vmem:[%s330 + $0x38] sm:$0xff]
        %v1559 = vmul.f32 %v1551, %v1549
        %v1560 = vmul.f32 %v1552, %v1550
        %v1561 = vmul.f32 %v1553, %v1549
        %v1562 = vmul.f32 %v1554, %v1550
        %v1563 = vmul.f32 %v1555, %v1549
        %v1564 = vmul.f32 %v1556, %v1550
        %v1565 = vmul.f32 %v1557, %v1549
        %v1566 = vmul.f32 %v1558, %v1550
        %1567 = vst.msk [vmem:[%s369] sm:$0xff] %vm404, %v1559
        %1568 = vst.msk [vmem:[%s369 + $0x8] sm:$0xff] %vm404, %v1560
        %1569 = vst.msk [vmem:[%s369 + $0x10] sm:$0xff] %vm404, %v1561
        %1570 = vst.msk [vmem:[%s369 + $0x18] sm:$0xff] %vm404, %v1562
        %1571 = vst.msk [vmem:[%s369 + $0x20] sm:$0xff] %vm404, %v1563
        %1572 = vst.msk [vmem:[%s369 + $0x28] sm:$0xff] %vm404, %v1564
        %1573 = vst.msk [vmem:[%s369 + $0x30] sm:$0xff] %vm404, %v1565
        %1574 = vst.msk [vmem:[%s369 + $0x38] sm:$0xff] %vm404, %v1566
        %s1575 = sand.u32 %s236, 1
        %s1576 = scalar_lea.sflag [#allocation8], %s1575
        %s1577 = sand.u32 %s236, 1
        %s1578 = smul.addr %s1577, 64
        %s1579 = scalar_lea.vmem [#allocation9], %s1578
        // Predicated region
        $region57: #{tpu_custom_call.1} parent=51 // pred_check
          %p1580 = pneg %p246
        $region58: #{tpu_custom_call.1} parent=51 // pred_check_branch
          %1582 = sbr.rel (%p1580) target = $region60
        $region59: #{tpu_custom_call.1} parent=51 // pred_region
          %s1583 = smul.u32 2, %s37
          %s1585 = ssub.s32 1024, 1024
          %1586 = vsyncadd %s1576, %s1585
          %s1587 = smul.addr %s36, 8
          %s1588 = sadd.s32 %s1583, %s1587
          %s1589 = smul.addr %s1588, 128
          %s1590 = scalar_lea.hbm %s9, %s1589
          %s1591 = sshll.u32 %s1579, 4
          %s1592 = int_to_ptr.vmem [resolvable:$true] %s1591
          %1597 = dma.vmem_to_hbm [thread:$0]  %s1592, 1024, %s1590, %s1576, 128, 128, 8
        $region60: #{tpu_custom_call.1} parent=51 // pred_fallthru
          _
      $region52: #{tpu_custom_call.1} parent=5 // pred_fallthru
        _
      %p1598 = scmp.le.s32.totalorder 2, %s27
      // Predicated region
      $region61: #{tpu_custom_call.1} parent=5 // pred_check
        %p1599 = pneg %p1598
      $region62: #{tpu_custom_call.1} parent=5 // pred_check_branch
        %1601 = sbr.rel (%p1599) target = $region64
      $region63: #{tpu_custom_call.1} parent=5 // pred_region
        %s1602 = ssub.s32 %s27, 2
        // Predicated region
        $region65: #{tpu_custom_call.1} parent=63 // pred_check
          %p1603 = pneg %p252
        $region66: #{tpu_custom_call.1} parent=63 // pred_check_branch
          %1605 = sbr.rel (%p1603) target = $region68
        $region67: #{tpu_custom_call.1} parent=63 // pred_region
          %s1606 = sand.u32 %s237, 1
          %s1607 = scalar_lea.sflag [#allocation8], %s1606
          %s1608 = sand.u32 %s237, 1
          %s1609 = smul.addr %s1608, 64
          %s1610 = scalar_lea.vmem [#allocation9], %s1609
          %1611 = dma.done %s1607, 1024
        $region68: #{tpu_custom_call.1} parent=63 // pred_fallthru
          _
      $region64: #{tpu_custom_call.1} parent=5 // pred_fallthru
        _
    $region6: #{tpu_custom_call.1} parent=1 // loop_footer
      %s31 = sadd.s32 1, %s27
    $region7: #{tpu_custom_call.1} parent=1 // loop_footer_branch
      %26 = sbr.rel target = $region3
    $region8: #{tpu_custom_call.1} parent=1 // loop_exit
      _
    %1612 = vsyncpa [#allocation7], 1
    %s1613 = scalar_lea.sflag [#allocation7], 1
    %1614 = vsyncpa %s1613, 1
    %1615 = vsyncpa [#allocation8], 1
    %s1616 = scalar_lea.sflag [#allocation8], 1
    %1617 = vsyncpa %s1616, 1

</llo_original>
